<compile_context>
chip_gen: v5e
topology: v5e:2x2
jax: 0.10.0
libtpu: 0.0.40
codegen_flags: <defaults>
</compile_context>

<pallas_src>
import math
from functools import partial

import numpy as np
import jax
import jax.numpy as jnp
from jax import lax
from jax.experimental import pallas as pl
from jax.experimental.pallas import tpu as pltpu


def _stock_cnn_kernel(
    x_ref,                         # (1, TB*L, C_in)
    sel1_ref, sel2_ref, sel3_ref,  # (2, TB*L1, TB*L), (2, TB*L2, TB*L1), (2, TB*S, TB*L2)
    w1_ref, b1_ref,                # (C_in, 64), (1, 64)
    w2_ref, b2_ref,                # (64, 128), (1, 128)
    w3_ref, b3_ref,                # (128, 256), (1, 256)
    wvqk_ref, bvqk_ref,            # (256, 256+32+32), (1, 320)   [V | Q*scale | K]
    amask_ref, mavg_ref,           # (TB*S, TB*S) additive mask, (TB, TB*S) query-mean
    wf1_ref, bf1_ref,              # (256, 512), (1, 512)
    wf2_ref, bf2_ref,              # (512, 128), (1, 128)
    wf3_ref, bf3_ref,              # (128, NCP), (1, NCP)  zero-padded to >=128 lanes
    out_ref,                       # (1, TB, NCP)
    *, v_dim, q_dim,
):
    def conv_relu_pool(h, w_ref, b_ref, sel_ref):
        # Pointwise conv on all TILE_B*Lin rows at once (batched MXU matmul).
        z = jnp.dot(h, w_ref[...], preferred_element_type=jnp.float32)
        b = b_ref[...]
        # Left / right element of every MaxPool pair gathered via constant 0/1
        # selection matmuls; all-zero selector rows are Conv1d padding -> relu(bias).
        left = jnp.maximum(
            jnp.dot(sel_ref[0], z, preferred_element_type=jnp.float32) + b, 0.0)
        right = jnp.maximum(
            jnp.dot(sel_ref[1], z, preferred_element_type=jnp.float32) + b, 0.0)
        return jnp.maximum(left, right)

    h = x_ref[0]                                         # (TB*L, C_in)
    h = conv_relu_pool(h, w1_ref, b1_ref, sel1_ref)      # (TB*L1, 64)
    h = conv_relu_pool(h, w2_ref, b2_ref, sel2_ref)      # (TB*L2, 128)
    h = conv_relu_pool(h, w3_ref, b3_ref, sel3_ref)      # (TB*S, 256)

    # --- SelfAttention over all TILE_B samples at once (block-diagonal softmax) ---
    # TODO(synk): SelfAttention.gamma is declared but never used in forward(); omitted.
    vqk = jnp.dot(h, wvqk_ref[...], preferred_element_type=jnp.float32) + bvqk_ref[...]
    v = vqk[:, :v_dim]                                   # (TB*S, 256)
    q = vqk[:, v_dim:v_dim + q_dim]                      # (TB*S, 32), 1/sqrt(256) folded in
    k = vqk[:, v_dim + q_dim:v_dim + 2 * q_dim]          # (TB*S, 32)
    s = lax.dot_general(q, k, (((1,), (1,)), ((), ())),
                        preferred_element_type=jnp.float32)   # (TB*S, TB*S)
    s = s + amask_ref[...]                               # -1e30 off the per-sample blocks
    s = s - jnp.max(s, axis=-1, keepdims=True)
    e = jnp.exp(s)
    p = e * pl.reciprocal(jnp.sum(e, axis=-1, keepdims=True), approx=True)
    # Mean over each sample's queries folded in *before* the value matmul.
    pm = jnp.dot(mavg_ref[...], p, preferred_element_type=jnp.float32)    # (TB, TB*S)
    ctx = jnp.dot(pm, v, preferred_element_type=jnp.float32)              # (TB, 256)

    # --- MLP head (batched, lane-dense padded output) ---
    f1 = jnp.maximum(
        jnp.dot(ctx, wf1_ref[...], preferred_element_type=jnp.float32) + bf1_ref[...], 0.0)
    f2 = jnp.maximum(
        jnp.dot(f1, wf2_ref[...], preferred_element_type=jnp.float32) + bf2_ref[...], 0.0)
    out_ref[0] = jnp.dot(f2, wf3_ref[...],
                         preferred_element_type=jnp.float32) + bf3_ref[...]


_LANES = 128


def _pool_len(n):
    # Conv1d(k=1, stride=1, padding=1) -> length n+2; MaxPool1d(2,2,0) -> floor((n+2)/2).
    return (n + 2) // 2


def _pool_selectors(tile_b, lin):
    """0/1 matrices picking the left/right element of every MaxPool pair from the
    flattened (tile_b*lin) conv rows.  All-zero rows correspond to Conv1d padding."""
    lp = _pool_len(lin)
    left = np.zeros((tile_b * lp, tile_b * lin), np.float32)
    right = np.zeros((tile_b * lp, tile_b * lin), np.float32)
    for b in range(tile_b):
        for i in range(lp):
            li = 2 * i - 1   # padded position 2*i     -> conv row 2*i-1 (or left pad)
            ri = 2 * i       # padded position 2*i + 1 -> conv row 2*i   (or right pad)
            if 0 <= li < lin:
                left[b * lp + i, b * lin + li] = 1.0
            if ri < lin:
                right[b * lp + i, b * lin + ri] = 1.0
    return jnp.asarray(np.stack([left, right]))


@partial(jax.jit, static_argnames=("tile_b",))
def stock_cnn_forward(x_ncl, params, *, tile_b=8):
    B, C_in, L = x_ncl.shape
    L1 = _pool_len(L)
    L2 = _pool_len(L1)
    S = _pool_len(L2)
    NC = params["wf3"].shape[1]
    ncp = max(_LANES, ((NC + _LANES - 1) // _LANES) * _LANES)
    v_dim = params["wv"].shape[1]
    q_dim = params["wq"].shape[1]
    embed = params["wf1"].shape[0]          # 256

    tile_b = max(1, min(tile_b, B))
    num_tiles = pl.cdiv(B, tile_b)
    b_pad = num_tiles * tile_b

    # NCL -> channel-last, pad batch to a multiple of tile_b, and present each batch
    # tile as one lane-dense (tile_b*L, C_in) slab to the kernel (no in-kernel reshape).
    x = jnp.transpose(x_ncl, (0, 2, 1)).astype(jnp.float32)
    if b_pad != B:
        x = jnp.concatenate([x, jnp.zeros((b_pad - B, L, C_in), jnp.float32)], axis=0)
    x = x.reshape(num_tiles, tile_b * L, C_in)

    # Fused [V | Q | K] projection with the 1/sqrt(embed) score scale folded into Q.
    scale = 1.0 / math.sqrt(float(embed))
    wvqk = jnp.concatenate([params["wv"], params["wq"] * scale, params["wk"]], axis=1)
    bvqk = jnp.concatenate([params["bv"], params["bq"] * scale, params["bk"]], axis=1)

    # Zero-pad the final Linear to >=128 output lanes (lane-dense stores).
    wf3p = jnp.zeros((params["wf3"].shape[0], ncp), jnp.float32).at[:, :NC].set(params["wf3"])
    bf3p = jnp.zeros((1, ncp), jnp.float32).at[:, :NC].set(params["bf3"])

    # Constant pooling selectors, block-diagonal attention mask, per-sample query-mean.
    sel1 = _pool_selectors(tile_b, L)
    sel2 = _pool_selectors(tile_b, L1)
    sel3 = _pool_selectors(tile_b, L2)
    tbs = tile_b * S
    blk = np.arange(tbs) // S
    amask = jnp.asarray(
        np.where(blk[:, None] == blk[None, :], 0.0, -1e30).astype(np.float32))
    mavg_np = np.zeros((tile_b, tbs), np.float32)
    for b in range(tile_b):
        mavg_np[b, b * S:(b + 1) * S] = 1.0 / S
    mavg = jnp.asarray(mavg_np)

    weights = [sel1, sel2, sel3,
               params["w1"], params["b1"], params["w2"], params["b2"],
               params["w3"], params["b3"], wvqk, bvqk, amask, mavg,
               params["wf1"], params["bf1"], params["wf2"], params["bf2"],
               wf3p, bf3p]

    def full_spec(a):
        nd = a.ndim
        # Constant block index -> weight tile stays resident across the grid.
        return pl.BlockSpec(a.shape, lambda t, _nd=nd: (0,) * _nd)

    in_specs = [pl.BlockSpec((1, tile_b * L, C_in), lambda t: (t, 0, 0))]
    in_specs += [full_spec(w) for w in weights]

    kernel = partial(_stock_cnn_kernel, v_dim=v_dim, q_dim=q_dim)
    out = pl.pallas_call(
        kernel,
        out_shape=jax.ShapeDtypeStruct((num_tiles, tile_b, ncp), jnp.float32),
        grid_spec=pltpu.PrefetchScalarGridSpec(
            num_scalar_prefetch=0,
            grid=(num_tiles,),
            in_specs=in_specs,
            out_specs=pl.BlockSpec((1, tile_b, ncp), lambda t: (t, 0, 0)),
        ),
        compiler_params=pltpu.CompilerParams(
            dimension_semantics=("parallel",)),
    )(x, *weights)
    return out.reshape(b_pad, ncp)[:B, :NC]


def reference_forward(x_ncl, p):
    """Pure-JAX reference matching the PyTorch forward."""
    x = jnp.transpose(x_ncl, (0, 2, 1)).astype(jnp.float32)

    def conv_relu_pool(h, w, b):
        B = h.shape[0]
        y = jnp.einsum("blc,cd->bld", h, w) + b[None]
        pad = jnp.broadcast_to(b[None], (B, 1, w.shape[1]))
        y = jnp.concatenate([pad, y, pad], axis=1)
        y = jnp.maximum(y, 0.0)
        lp = y.shape[1] // 2
        return jnp.maximum(y[:, 0:2 * lp:2, :], y[:, 1:2 * lp:2, :])

    h = conv_relu_pool(x, p["w1"], p["b1"])
    h = conv_relu_pool(h, p["w2"], p["b2"])
    h = conv_relu_pool(h, p["w3"], p["b3"])
    q = jnp.einsum("bsc,cd->bsd", h, p["wq"]) + p["bq"][None]
    k = jnp.einsum("bsc,cd->bsd", h, p["wk"]) + p["bk"][None]
    v = jnp.einsum("bsc,cd->bsd", h, p["wv"]) + p["bv"][None]
    scores = jnp.einsum("bqd,bkd->bqk", q, k) / math.sqrt(256.0)
    attn = jax.nn.softmax(scores, axis=-1)
    ctx = jnp.einsum("bqk,bkd->bqd", attn, v).mean(axis=1)
    f = jnp.maximum(ctx @ p["wf1"] + p["bf1"], 0.0)
    f = jnp.maximum(f @ p["wf2"] + p["bf2"], 0.0)
    return f @ p["wf3"] + p["bf3"]


def init_params(key, input_size, num_classes):
    """Deterministic, PyTorch-default-style uniform(+-1/sqrt(fan_in)) init.
    Weights stored (fan_in, fan_out); biases stored (1, fan_out)."""
    def dense(k, fan_in, fan_out):
        kw, kb = jax.random.split(k)
        bound = 1.0 / math.sqrt(fan_in)
        w = jax.random.uniform(kw, (fan_in, fan_out), jnp.float32, -bound, bound)
        b = jax.random.uniform(kb, (1, fan_out), jnp.float32, -bound, bound)
        return w, b

    keys = jax.random.split(key, 9)
    p = {}
    p["w1"], p["b1"] = dense(keys[0], input_size, 64)       # Conv1d(input_size, 64, 1)
    p["w2"], p["b2"] = dense(keys[1], 64, 128)               # Conv1d(64, 128, 1)
    p["w3"], p["b3"] = dense(keys[2], 128, 256)              # Conv1d(128, 256, 1)
    p["wq"], p["bq"] = dense(keys[3], 256, 32)               # Linear(256, 32)
    p["wk"], p["bk"] = dense(keys[4], 256, 32)               # Linear(256, 32)
    p["wv"], p["bv"] = dense(keys[5], 256, 256)              # Linear(256, 256)
    p["wf1"], p["bf1"] = dense(keys[6], 256, 512)            # Linear(256, 512)
    p["wf2"], p["bf2"] = dense(keys[7], 512, 128)            # Linear(512, 128)
    p["wf3"], p["bf3"] = dense(keys[8], 128, num_classes)    # Linear(128, num_classes)
    return p


if __name__ == "__main__":
    B, C_in, L, NC = 8, 8, 16, 3
    key = jax.random.PRNGKey(0)
    kx, kp = jax.random.split(key)
    x = jax.random.normal(kx, (B, C_in, L), jnp.float32)     # NCL, like PyTorch Conv1d input
    params = init_params(kp, C_in, NC)

    out = stock_cnn_forward(x, params, tile_b=4)             # grid = 2 tiles of 4 samples
    out = jax.block_until_ready(out)

    ref = reference_forward(x, params)
    assert out.shape == (B, NC), out.shape
    max_err = float(jnp.max(jnp.abs(out - ref)))
    assert max_err < 1e-2, f"kernel/reference mismatch: max abs err = {max_err}"
    print("KERNEL_OK")
</pallas_src>

<mosaic_0001>
module attributes {stable_mosaic.version = 11 : i64} {
  func.func @_stock_cnn_kernel(%arg0: i32, %arg1: memref<1x64x8xf32, #tpu.memory_space<vmem>>, %arg2: memref<2x36x64xf32, #tpu.memory_space<vmem>>, %arg3: memref<2x20x36xf32, #tpu.memory_space<vmem>>, %arg4: memref<2x12x20xf32, #tpu.memory_space<vmem>>, %arg5: memref<8x64xf32, #tpu.memory_space<vmem>>, %arg6: memref<1x64xf32, #tpu.memory_space<vmem>>, %arg7: memref<64x128xf32, #tpu.memory_space<vmem>>, %arg8: memref<1x128xf32, #tpu.memory_space<vmem>>, %arg9: memref<128x256xf32, #tpu.memory_space<vmem>>, %arg10: memref<1x256xf32, #tpu.memory_space<vmem>>, %arg11: memref<256x320xf32, #tpu.memory_space<vmem>>, %arg12: memref<1x320xf32, #tpu.memory_space<vmem>>, %arg13: memref<12x12xf32, #tpu.memory_space<vmem>>, %arg14: memref<4x12xf32, #tpu.memory_space<vmem>>, %arg15: memref<256x512xf32, #tpu.memory_space<vmem>>, %arg16: memref<1x512xf32, #tpu.memory_space<vmem>>, %arg17: memref<512x128xf32, #tpu.memory_space<vmem>>, %arg18: memref<1x128xf32, #tpu.memory_space<vmem>>, %arg19: memref<128x128xf32, #tpu.memory_space<vmem>>, %arg20: memref<1x128xf32, #tpu.memory_space<vmem>>, %arg21: memref<1x4x128xf32, #tpu.memory_space<vmem>>) attributes {dimension_semantics = [#tpu.dimension_semantics<parallel>], iteration_bounds = array<i64: 2>, scalar_prefetch = 0 : i64, scratch_operands = 0 : i64, tpu.core_type = #tpu.core_type<tc>, window_params = [{transform_indices = @transform_0, window_bounds = array<i64: 1, 64, 8>}, {pipeline_mode = #tpu.pipeline_mode<synchronous>, transform_indices = @transform_1, window_bounds = array<i64: 2, 36, 64>}, {pipeline_mode = #tpu.pipeline_mode<synchronous>, transform_indices = @transform_2, window_bounds = array<i64: 2, 20, 36>}, {pipeline_mode = #tpu.pipeline_mode<synchronous>, transform_indices = @transform_3, window_bounds = array<i64: 2, 12, 20>}, {pipeline_mode = #tpu.pipeline_mode<synchronous>, transform_indices = @transform_4, window_bounds = array<i64: 8, 64>}, {pipeline_mode = #tpu.pipeline_mode<synchronous>, transform_indices = @transform_5, window_bounds = array<i64: 1, 64>}, {pipeline_mode = #tpu.pipeline_mode<synchronous>, transform_indices = @transform_6, window_bounds = array<i64: 64, 128>}, {pipeline_mode = #tpu.pipeline_mode<synchronous>, transform_indices = @transform_7, window_bounds = array<i64: 1, 128>}, {pipeline_mode = #tpu.pipeline_mode<synchronous>, transform_indices = @transform_8, window_bounds = array<i64: 128, 256>}, {pipeline_mode = #tpu.pipeline_mode<synchronous>, transform_indices = @transform_9, window_bounds = array<i64: 1, 256>}, {pipeline_mode = #tpu.pipeline_mode<synchronous>, transform_indices = @transform_10, window_bounds = array<i64: 256, 320>}, {pipeline_mode = #tpu.pipeline_mode<synchronous>, transform_indices = @transform_11, window_bounds = array<i64: 1, 320>}, {pipeline_mode = #tpu.pipeline_mode<synchronous>, transform_indices = @transform_12, window_bounds = array<i64: 12, 12>}, {pipeline_mode = #tpu.pipeline_mode<synchronous>, transform_indices = @transform_13, window_bounds = array<i64: 4, 12>}, {pipeline_mode = #tpu.pipeline_mode<synchronous>, transform_indices = @transform_14, window_bounds = array<i64: 256, 512>}, {pipeline_mode = #tpu.pipeline_mode<synchronous>, transform_indices = @transform_15, window_bounds = array<i64: 1, 512>}, {pipeline_mode = #tpu.pipeline_mode<synchronous>, transform_indices = @transform_16, window_bounds = array<i64: 512, 128>}, {pipeline_mode = #tpu.pipeline_mode<synchronous>, transform_indices = @transform_17, window_bounds = array<i64: 1, 128>}, {pipeline_mode = #tpu.pipeline_mode<synchronous>, transform_indices = @transform_18, window_bounds = array<i64: 128, 128>}, {pipeline_mode = #tpu.pipeline_mode<synchronous>, transform_indices = @transform_19, window_bounds = array<i64: 1, 128>}, {transform_indices = @transform_20, window_bounds = array<i64: 1, 4, 128>}]} {
    %c0 = arith.constant 0 : index
    %c0_0 = arith.constant 0 : index
    %c0_1 = arith.constant 0 : index
    %0 = vector.load %arg1[%c0, %c0_0, %c0_1] : memref<1x64x8xf32, #tpu.memory_space<vmem>>, vector<1x64x8xf32>
    %1 = vector.shape_cast %0 : vector<1x64x8xf32> to vector<64x8xf32>
    %c0_2 = arith.constant 0 : index
    %c0_3 = arith.constant 0 : index
    %2 = vector.load %arg5[%c0_2, %c0_3] : memref<8x64xf32, #tpu.memory_space<vmem>>, vector<8x64xf32>
    %cst = arith.constant dense<0.000000e+00> : vector<64x64xf32>
    %3 = tpu.matmul %1, %2, %cst {dimension_numbers = #tpu.dot_dimension_numbers<[1], [0], [0], [1], [0, 0, 1, 1], [], []>} : vector<64x8xf32>, vector<8x64xf32>, vector<64x64xf32> -> vector<64x64xf32>
    %c0_4 = arith.constant 0 : index
    %c0_5 = arith.constant 0 : index
    %4 = vector.load %arg6[%c0_4, %c0_5] : memref<1x64xf32, #tpu.memory_space<vmem>>, vector<1x64xf32>
    %c0_6 = arith.constant 0 : index
    %c0_7 = arith.constant 0 : index
    %c0_8 = arith.constant 0 : index
    %5 = vector.load %arg2[%c0_6, %c0_7, %c0_8] : memref<2x36x64xf32, #tpu.memory_space<vmem>>, vector<1x36x64xf32>
    %6 = vector.shape_cast %5 : vector<1x36x64xf32> to vector<36x64xf32>
    %cst_9 = arith.constant dense<0.000000e+00> : vector<36x64xf32>
    %7 = tpu.matmul %6, %3, %cst_9 {dimension_numbers = #tpu.dot_dimension_numbers<[1], [0], [0], [1], [0, 0, 1, 1], [], []>} : vector<36x64xf32>, vector<64x64xf32>, vector<36x64xf32> -> vector<36x64xf32>
    %8 = vector.broadcast %4 : vector<1x64xf32> to vector<36x64xf32>
    %9 = arith.addf %7, %8 : vector<36x64xf32>
    %cst_10 = arith.constant 0.000000e+00 : f32
    %10 = vector.broadcast %cst_10 : f32 to vector<36x64xf32>
    %11 = arith.maximumf %9, %10 : vector<36x64xf32>
    %c1 = arith.constant 1 : index
    %c0_11 = arith.constant 0 : index
    %c0_12 = arith.constant 0 : index
    %12 = vector.load %arg2[%c1, %c0_11, %c0_12] : memref<2x36x64xf32, #tpu.memory_space<vmem>>, vector<1x36x64xf32>
    %13 = vector.shape_cast %12 : vector<1x36x64xf32> to vector<36x64xf32>
    %cst_13 = arith.constant dense<0.000000e+00> : vector<36x64xf32>
    %14 = tpu.matmul %13, %3, %cst_13 {dimension_numbers = #tpu.dot_dimension_numbers<[1], [0], [0], [1], [0, 0, 1, 1], [], []>} : vector<36x64xf32>, vector<64x64xf32>, vector<36x64xf32> -> vector<36x64xf32>
    %15 = vector.broadcast %4 : vector<1x64xf32> to vector<36x64xf32>
    %16 = arith.addf %14, %15 : vector<36x64xf32>
    %cst_14 = arith.constant 0.000000e+00 : f32
    %17 = vector.broadcast %cst_14 : f32 to vector<36x64xf32>
    %18 = arith.maximumf %16, %17 : vector<36x64xf32>
    %19 = arith.maximumf %11, %18 : vector<36x64xf32>
    %c0_15 = arith.constant 0 : index
    %c0_16 = arith.constant 0 : index
    %20 = vector.load %arg7[%c0_15, %c0_16] : memref<64x128xf32, #tpu.memory_space<vmem>>, vector<64x128xf32>
    %cst_17 = arith.constant dense<0.000000e+00> : vector<36x128xf32>
    %21 = tpu.matmul %19, %20, %cst_17 {dimension_numbers = #tpu.dot_dimension_numbers<[1], [0], [0], [1], [0, 0, 1, 1], [], []>} : vector<36x64xf32>, vector<64x128xf32>, vector<36x128xf32> -> vector<36x128xf32>
    %c0_18 = arith.constant 0 : index
    %c0_19 = arith.constant 0 : index
    %22 = vector.load %arg8[%c0_18, %c0_19] : memref<1x128xf32, #tpu.memory_space<vmem>>, vector<1x128xf32>
    %c0_20 = arith.constant 0 : index
    %c0_21 = arith.constant 0 : index
    %c0_22 = arith.constant 0 : index
    %23 = vector.load %arg3[%c0_20, %c0_21, %c0_22] : memref<2x20x36xf32, #tpu.memory_space<vmem>>, vector<1x20x36xf32>
    %24 = vector.shape_cast %23 : vector<1x20x36xf32> to vector<20x36xf32>
    %cst_23 = arith.constant dense<0.000000e+00> : vector<20x128xf32>
    %25 = tpu.matmul %24, %21, %cst_23 {dimension_numbers = #tpu.dot_dimension_numbers<[1], [0], [0], [1], [0, 0, 1, 1], [], []>} : vector<20x36xf32>, vector<36x128xf32>, vector<20x128xf32> -> vector<20x128xf32>
    %26 = vector.broadcast %22 : vector<1x128xf32> to vector<20x128xf32>
    %27 = arith.addf %25, %26 : vector<20x128xf32>
    %cst_24 = arith.constant 0.000000e+00 : f32
    %28 = vector.broadcast %cst_24 : f32 to vector<20x128xf32>
    %29 = arith.maximumf %27, %28 : vector<20x128xf32>
    %c1_25 = arith.constant 1 : index
    %c0_26 = arith.constant 0 : index
    %c0_27 = arith.constant 0 : index
    %30 = vector.load %arg3[%c1_25, %c0_26, %c0_27] : memref<2x20x36xf32, #tpu.memory_space<vmem>>, vector<1x20x36xf32>
    %31 = vector.shape_cast %30 : vector<1x20x36xf32> to vector<20x36xf32>
    %cst_28 = arith.constant dense<0.000000e+00> : vector<20x128xf32>
    %32 = tpu.matmul %31, %21, %cst_28 {dimension_numbers = #tpu.dot_dimension_numbers<[1], [0], [0], [1], [0, 0, 1, 1], [], []>} : vector<20x36xf32>, vector<36x128xf32>, vector<20x128xf32> -> vector<20x128xf32>
    %33 = vector.broadcast %22 : vector<1x128xf32> to vector<20x128xf32>
    %34 = arith.addf %32, %33 : vector<20x128xf32>
    %cst_29 = arith.constant 0.000000e+00 : f32
    %35 = vector.broadcast %cst_29 : f32 to vector<20x128xf32>
    %36 = arith.maximumf %34, %35 : vector<20x128xf32>
    %37 = arith.maximumf %29, %36 : vector<20x128xf32>
    %c0_30 = arith.constant 0 : index
    %c0_31 = arith.constant 0 : index
    %38 = vector.load %arg9[%c0_30, %c0_31] : memref<128x256xf32, #tpu.memory_space<vmem>>, vector<128x256xf32>
    %cst_32 = arith.constant dense<0.000000e+00> : vector<20x256xf32>
    %39 = tpu.matmul %37, %38, %cst_32 {dimension_numbers = #tpu.dot_dimension_numbers<[1], [0], [0], [1], [0, 0, 1, 1], [], []>} : vector<20x128xf32>, vector<128x256xf32>, vector<20x256xf32> -> vector<20x256xf32>
    %c0_33 = arith.constant 0 : index
    %c0_34 = arith.constant 0 : index
    %40 = vector.load %arg10[%c0_33, %c0_34] : memref<1x256xf32, #tpu.memory_space<vmem>>, vector<1x256xf32>
    %c0_35 = arith.constant 0 : index
    %c0_36 = arith.constant 0 : index
    %c0_37 = arith.constant 0 : index
    %41 = vector.load %arg4[%c0_35, %c0_36, %c0_37] : memref<2x12x20xf32, #tpu.memory_space<vmem>>, vector<1x12x20xf32>
    %42 = vector.shape_cast %41 : vector<1x12x20xf32> to vector<12x20xf32>
    %cst_38 = arith.constant dense<0.000000e+00> : vector<12x256xf32>
    %43 = tpu.matmul %42, %39, %cst_38 {dimension_numbers = #tpu.dot_dimension_numbers<[1], [0], [0], [1], [0, 0, 1, 1], [], []>} : vector<12x20xf32>, vector<20x256xf32>, vector<12x256xf32> -> vector<12x256xf32>
    %44 = vector.broadcast %40 : vector<1x256xf32> to vector<12x256xf32>
    %45 = arith.addf %43, %44 : vector<12x256xf32>
    %cst_39 = arith.constant 0.000000e+00 : f32
    %46 = vector.broadcast %cst_39 : f32 to vector<12x256xf32>
    %47 = arith.maximumf %45, %46 : vector<12x256xf32>
    %c1_40 = arith.constant 1 : index
    %c0_41 = arith.constant 0 : index
    %c0_42 = arith.constant 0 : index
    %48 = vector.load %arg4[%c1_40, %c0_41, %c0_42] : memref<2x12x20xf32, #tpu.memory_space<vmem>>, vector<1x12x20xf32>
    %49 = vector.shape_cast %48 : vector<1x12x20xf32> to vector<12x20xf32>
    %cst_43 = arith.constant dense<0.000000e+00> : vector<12x256xf32>
    %50 = tpu.matmul %49, %39, %cst_43 {dimension_numbers = #tpu.dot_dimension_numbers<[1], [0], [0], [1], [0, 0, 1, 1], [], []>} : vector<12x20xf32>, vector<20x256xf32>, vector<12x256xf32> -> vector<12x256xf32>
    %51 = vector.broadcast %40 : vector<1x256xf32> to vector<12x256xf32>
    %52 = arith.addf %50, %51 : vector<12x256xf32>
    %cst_44 = arith.constant 0.000000e+00 : f32
    %53 = vector.broadcast %cst_44 : f32 to vector<12x256xf32>
    %54 = arith.maximumf %52, %53 : vector<12x256xf32>
    %55 = arith.maximumf %47, %54 : vector<12x256xf32>
    %c0_45 = arith.constant 0 : index
    %c0_46 = arith.constant 0 : index
    %56 = vector.load %arg11[%c0_45, %c0_46] : memref<256x320xf32, #tpu.memory_space<vmem>>, vector<256x320xf32>
    %cst_47 = arith.constant dense<0.000000e+00> : vector<12x320xf32>
    %57 = tpu.matmul %55, %56, %cst_47 {dimension_numbers = #tpu.dot_dimension_numbers<[1], [0], [0], [1], [0, 0, 1, 1], [], []>} : vector<12x256xf32>, vector<256x320xf32>, vector<12x320xf32> -> vector<12x320xf32>
    %c0_48 = arith.constant 0 : index
    %c0_49 = arith.constant 0 : index
    %58 = vector.load %arg12[%c0_48, %c0_49] : memref<1x320xf32, #tpu.memory_space<vmem>>, vector<1x320xf32>
    %59 = vector.broadcast %58 : vector<1x320xf32> to vector<12x320xf32>
    %60 = arith.addf %57, %59 : vector<12x320xf32>
    %61 = vector.extract_strided_slice %60 {offsets = [0, 0], sizes = [12, 256], strides = [1, 1]} : vector<12x320xf32> to vector<12x256xf32>
    %62 = vector.extract_strided_slice %60 {offsets = [0, 256], sizes = [12, 32], strides = [1, 1]} : vector<12x320xf32> to vector<12x32xf32>
    %63 = vector.extract_strided_slice %60 {offsets = [0, 288], sizes = [12, 32], strides = [1, 1]} : vector<12x320xf32> to vector<12x32xf32>
    %cst_50 = arith.constant dense<0.000000e+00> : vector<12x12xf32>
    %64 = tpu.matmul %62, %63, %cst_50 {dimension_numbers = #tpu.dot_dimension_numbers<[1], [1], [0], [0], [0, 0, 1, 0], [], []>} : vector<12x32xf32>, vector<12x32xf32>, vector<12x12xf32> -> vector<12x12xf32>
    %c0_51 = arith.constant 0 : index
    %c0_52 = arith.constant 0 : index
    %65 = vector.load %arg13[%c0_51, %c0_52] : memref<12x12xf32, #tpu.memory_space<vmem>>, vector<12x12xf32>
    %66 = arith.addf %64, %65 : vector<12x12xf32>
    %cst_53 = arith.constant dense<0xFF800000> : vector<12xf32>
    %67 = vector.multi_reduction <maximumf>, %66, %cst_53 [1] : vector<12x12xf32> to vector<12xf32>
    %68 = vector.shape_cast %67 : vector<12xf32> to vector<12x1xf32>
    %69 = vector.broadcast %68 : vector<12x1xf32> to vector<12x12xf32>
    %70 = arith.subf %66, %69 : vector<12x12xf32>
    %71 = math.exp %70 : vector<12x12xf32>
    %cst_54 = arith.constant dense<0.000000e+00> : vector<12xf32>
    %72 = vector.multi_reduction <add>, %71, %cst_54 [1] : vector<12x12xf32> to vector<12xf32>
    %73 = vector.shape_cast %72 : vector<12xf32> to vector<12x1xf32>
    %74 = tpu.reciprocal %73 {approx = true} : vector<12x1xf32> -> vector<12x1xf32>
    %75 = vector.broadcast %74 : vector<12x1xf32> to vector<12x12xf32>
    %76 = arith.mulf %71, %75 : vector<12x12xf32>
    %c0_55 = arith.constant 0 : index
    %c0_56 = arith.constant 0 : index
    %77 = vector.load %arg14[%c0_55, %c0_56] : memref<4x12xf32, #tpu.memory_space<vmem>>, vector<4x12xf32>
    %cst_57 = arith.constant dense<0.000000e+00> : vector<4x12xf32>
    %78 = tpu.matmul %77, %76, %cst_57 {dimension_numbers = #tpu.dot_dimension_numbers<[1], [0], [0], [1], [0, 0, 1, 1], [], []>} : vector<4x12xf32>, vector<12x12xf32>, vector<4x12xf32> -> vector<4x12xf32>
    %cst_58 = arith.constant dense<0.000000e+00> : vector<4x256xf32>
    %79 = tpu.matmul %78, %61, %cst_58 {dimension_numbers = #tpu.dot_dimension_numbers<[1], [0], [0], [1], [0, 0, 1, 1], [], []>} : vector<4x12xf32>, vector<12x256xf32>, vector<4x256xf32> -> vector<4x256xf32>
    %c0_59 = arith.constant 0 : index
    %c0_60 = arith.constant 0 : index
    %80 = vector.load %arg15[%c0_59, %c0_60] : memref<256x512xf32, #tpu.memory_space<vmem>>, vector<256x512xf32>
    %cst_61 = arith.constant dense<0.000000e+00> : vector<4x512xf32>
    %81 = tpu.matmul %79, %80, %cst_61 {dimension_numbers = #tpu.dot_dimension_numbers<[1], [0], [0], [1], [0, 0, 1, 1], [], []>} : vector<4x256xf32>, vector<256x512xf32>, vector<4x512xf32> -> vector<4x512xf32>
    %c0_62 = arith.constant 0 : index
    %c0_63 = arith.constant 0 : index
    %82 = vector.load %arg16[%c0_62, %c0_63] : memref<1x512xf32, #tpu.memory_space<vmem>>, vector<1x512xf32>
    %83 = vector.broadcast %82 : vector<1x512xf32> to vector<4x512xf32>
    %84 = arith.addf %81, %83 : vector<4x512xf32>
    %cst_64 = arith.constant 0.000000e+00 : f32
    %85 = vector.broadcast %cst_64 : f32 to vector<4x512xf32>
    %86 = arith.maximumf %84, %85 : vector<4x512xf32>
    %c0_65 = arith.constant 0 : index
    %c0_66 = arith.constant 0 : index
    %87 = vector.load %arg17[%c0_65, %c0_66] : memref<512x128xf32, #tpu.memory_space<vmem>>, vector<512x128xf32>
    %cst_67 = arith.constant dense<0.000000e+00> : vector<4x128xf32>
    %88 = tpu.matmul %86, %87, %cst_67 {dimension_numbers = #tpu.dot_dimension_numbers<[1], [0], [0], [1], [0, 0, 1, 1], [], []>} : vector<4x512xf32>, vector<512x128xf32>, vector<4x128xf32> -> vector<4x128xf32>
    %c0_68 = arith.constant 0 : index
    %c0_69 = arith.constant 0 : index
    %89 = vector.load %arg18[%c0_68, %c0_69] : memref<1x128xf32, #tpu.memory_space<vmem>>, vector<1x128xf32>
    %90 = vector.broadcast %89 : vector<1x128xf32> to vector<4x128xf32>
    %91 = arith.addf %88, %90 : vector<4x128xf32>
    %cst_70 = arith.constant 0.000000e+00 : f32
    %92 = vector.broadcast %cst_70 : f32 to vector<4x128xf32>
    %93 = arith.maximumf %91, %92 : vector<4x128xf32>
    %c0_71 = arith.constant 0 : index
    %c0_72 = arith.constant 0 : index
    %94 = vector.load %arg19[%c0_71, %c0_72] : memref<128x128xf32, #tpu.memory_space<vmem>>, vector<128x128xf32>
    %cst_73 = arith.constant dense<0.000000e+00> : vector<4x128xf32>
    %95 = tpu.matmul %93, %94, %cst_73 {dimension_numbers = #tpu.dot_dimension_numbers<[1], [0], [0], [1], [0, 0, 1, 1], [], []>} : vector<4x128xf32>, vector<128x128xf32>, vector<4x128xf32> -> vector<4x128xf32>
    %c0_74 = arith.constant 0 : index
    %c0_75 = arith.constant 0 : index
    %96 = vector.load %arg20[%c0_74, %c0_75] : memref<1x128xf32, #tpu.memory_space<vmem>>, vector<1x128xf32>
    %97 = vector.broadcast %96 : vector<1x128xf32> to vector<4x128xf32>
    %98 = arith.addf %95, %97 : vector<4x128xf32>
    %c0_76 = arith.constant 0 : index
    %c0_77 = arith.constant 0 : index
    %c0_78 = arith.constant 0 : index
    %99 = vector.load %arg21[%c0_76, %c0_77, %c0_78] : memref<1x4x128xf32, #tpu.memory_space<vmem>>, vector<1x4x128xf32>
    %100 = vector.shape_cast %99 : vector<1x4x128xf32> to vector<4x128xf32>
    %101 = vector.shape_cast %98 : vector<4x128xf32> to vector<1x4x128xf32>
    tpu.vector_store %arg21[%c0_76, %c0_77, %c0_78], %101 {strides = array<i32>} : memref<1x4x128xf32, #tpu.memory_space<vmem>>, vector<1x4x128xf32>,
    return
  }
  func.func @transform_0(%arg0: i32) -> (i32, i32, i32) {
    %c0_i32 = arith.constant 0 : i32
    %c0_i32_0 = arith.constant 0 : i32
    %c0_i32_1 = arith.constant 0 : i32
    return %arg0, %c0_i32, %c0_i32_0 : i32, i32, i32
  }
  func.func @transform_1(%arg0: i32) -> (i32, i32, i32) {
    %c0_i32 = arith.constant 0 : i32
    %c0_i32_0 = arith.constant 0 : i32
    %c0_i32_1 = arith.constant 0 : i32
    %c0_i32_2 = arith.constant 0 : i32
    return %c0_i32, %c0_i32_0, %c0_i32_1 : i32, i32, i32
  }
  func.func @transform_2(%arg0: i32) -> (i32, i32, i32) {
    %c0_i32 = arith.constant 0 : i32
    %c0_i32_0 = arith.constant 0 : i32
    %c0_i32_1 = arith.constant 0 : i32
    %c0_i32_2 = arith.constant 0 : i32
    return %c0_i32, %c0_i32_0, %c0_i32_1 : i32, i32, i32
  }
  func.func @transform_3(%arg0: i32) -> (i32, i32, i32) {
    %c0_i32 = arith.constant 0 : i32
    %c0_i32_0 = arith.constant 0 : i32
    %c0_i32_1 = arith.constant 0 : i32
    %c0_i32_2 = arith.constant 0 : i32
    return %c0_i32, %c0_i32_0, %c0_i32_1 : i32, i32, i32
  }
  func.func @transform_4(%arg0: i32) -> (i32, i32) {
    %c0_i32 = arith.constant 0 : i32
    %c0_i32_0 = arith.constant 0 : i32
    %c0_i32_1 = arith.constant 0 : i32
    return %c0_i32, %c0_i32_0 : i32, i32
  }
  func.func @transform_5(%arg0: i32) -> (i32, i32) {
    %c0_i32 = arith.constant 0 : i32
    %c0_i32_0 = arith.constant 0 : i32
    %c0_i32_1 = arith.constant 0 : i32
    return %c0_i32, %c0_i32_0 : i32, i32
  }
  func.func @transform_6(%arg0: i32) -> (i32, i32) {
    %c0_i32 = arith.constant 0 : i32
    %c0_i32_0 = arith.constant 0 : i32
    %c0_i32_1 = arith.constant 0 : i32
    return %c0_i32, %c0_i32_0 : i32, i32
  }
  func.func @transform_7(%arg0: i32) -> (i32, i32) {
    %c0_i32 = arith.constant 0 : i32
    %c0_i32_0 = arith.constant 0 : i32
    %c0_i32_1 = arith.constant 0 : i32
    return %c0_i32, %c0_i32_0 : i32, i32
  }
  func.func @transform_8(%arg0: i32) -> (i32, i32) {
    %c0_i32 = arith.constant 0 : i32
    %c0_i32_0 = arith.constant 0 : i32
    %c0_i32_1 = arith.constant 0 : i32
    return %c0_i32, %c0_i32_0 : i32, i32
  }
  func.func @transform_9(%arg0: i32) -> (i32, i32) {
    %c0_i32 = arith.constant 0 : i32
    %c0_i32_0 = arith.constant 0 : i32
    %c0_i32_1 = arith.constant 0 : i32
    return %c0_i32, %c0_i32_0 : i32, i32
  }
  func.func @transform_10(%arg0: i32) -> (i32, i32) {
    %c0_i32 = arith.constant 0 : i32
    %c0_i32_0 = arith.constant 0 : i32
    %c0_i32_1 = arith.constant 0 : i32
    return %c0_i32, %c0_i32_0 : i32, i32
  }
  func.func @transform_11(%arg0: i32) -> (i32, i32) {
    %c0_i32 = arith.constant 0 : i32
    %c0_i32_0 = arith.constant 0 : i32
    %c0_i32_1 = arith.constant 0 : i32
    return %c0_i32, %c0_i32_0 : i32, i32
  }
  func.func @transform_12(%arg0: i32) -> (i32, i32) {
    %c0_i32 = arith.constant 0 : i32
    %c0_i32_0 = arith.constant 0 : i32
    %c0_i32_1 = arith.constant 0 : i32
    return %c0_i32, %c0_i32_0 : i32, i32
  }
  func.func @transform_13(%arg0: i32) -> (i32, i32) {
    %c0_i32 = arith.constant 0 : i32
    %c0_i32_0 = arith.constant 0 : i32
    %c0_i32_1 = arith.constant 0 : i32
    return %c0_i32, %c0_i32_0 : i32, i32
  }
  func.func @transform_14(%arg0: i32) -> (i32, i32) {
    %c0_i32 = arith.constant 0 : i32
    %c0_i32_0 = arith.constant 0 : i32
    %c0_i32_1 = arith.constant 0 : i32
    return %c0_i32, %c0_i32_0 : i32, i32
  }
  func.func @transform_15(%arg0: i32) -> (i32, i32) {
    %c0_i32 = arith.constant 0 : i32
    %c0_i32_0 = arith.constant 0 : i32
    %c0_i32_1 = arith.constant 0 : i32
    return %c0_i32, %c0_i32_0 : i32, i32
  }
  func.func @transform_16(%arg0: i32) -> (i32, i32) {
    %c0_i32 = arith.constant 0 : i32
    %c0_i32_0 = arith.constant 0 : i32
    %c0_i32_1 = arith.constant 0 : i32
    return %c0_i32, %c0_i32_0 : i32, i32
  }
  func.func @transform_17(%arg0: i32) -> (i32, i32) {
    %c0_i32 = arith.constant 0 : i32
    %c0_i32_0 = arith.constant 0 : i32
    %c0_i32_1 = arith.constant 0 : i32
    return %c0_i32, %c0_i32_0 : i32, i32
  }
  func.func @transform_18(%arg0: i32) -> (i32, i32) {
    %c0_i32 = arith.constant 0 : i32
    %c0_i32_0 = arith.constant 0 : i32
    %c0_i32_1 = arith.constant 0 : i32
    return %c0_i32, %c0_i32_0 : i32, i32
  }
  func.func @transform_19(%arg0: i32) -> (i32, i32) {
    %c0_i32 = arith.constant 0 : i32
    %c0_i32_0 = arith.constant 0 : i32
    %c0_i32_1 = arith.constant 0 : i32
    return %c0_i32, %c0_i32_0 : i32, i32
  }
  func.func @transform_20(%arg0: i32) -> (i32, i32, i32) {
    %c0_i32 = arith.constant 0 : i32
    %c0_i32_0 = arith.constant 0 : i32
    %c0_i32_1 = arith.constant 0 : i32
    return %arg0, %c0_i32, %c0_i32_0 : i32, i32, i32
  }
}

</mosaic_0001>

<llo_original>
// kernel: stock_cnn_forward.1
$region0: #{stock_cnn_forward.1}
  #allocation0 [shape = 'u32[]', space=smem, size = 0x4, offset = 0x4, fixed_abs, tag = 'smem constant byte address 0x4 - core index']
  #allocation1 [shape = 'u32[72,128]{1,0:T(1,128)}', space=vmem, size = 0x9000, scoped, tag = 'internal scratch']
  %s0 = inlined_call_operand.vmem [shape: f32[2,64,8], index: 0, kind: input, shape index: {}]
  %s1 = inlined_call_operand.vmem [shape: f32[2,36,64], index: 1, kind: input, shape index: {}]
  %s2 = inlined_call_operand.vmem [shape: f32[2,20,36], index: 2, kind: input, shape index: {}]
  %s3 = inlined_call_operand.vmem [shape: f32[2,12,20], index: 3, kind: input, shape index: {}]
  %s4 = inlined_call_operand.vmem [shape: f32[8,64], index: 4, kind: input, shape index: {}]
  %s5 = inlined_call_operand.vmem [shape: f32[1,64], index: 5, kind: input, shape index: {}]
  %s6 = inlined_call_operand.vmem [shape: f32[64,128], index: 6, kind: input, shape index: {}]
  %s7 = inlined_call_operand.vmem [shape: f32[1,128], index: 7, kind: input, shape index: {}]
  %s8 = inlined_call_operand.vmem [shape: f32[128,256], index: 8, kind: input, shape index: {}]
  %s9 = inlined_call_operand.vmem [shape: f32[1,256], index: 9, kind: input, shape index: {}]
  %s10 = inlined_call_operand.vmem [shape: f32[256,320], index: 10, kind: input, shape index: {}]
  %s11 = inlined_call_operand.vmem [shape: f32[1,320], index: 11, kind: input, shape index: {}]
  %s12 = inlined_call_operand.vmem [shape: f32[12,12], index: 12, kind: input, shape index: {}]
  %s13 = inlined_call_operand.vmem [shape: f32[4,12], index: 13, kind: input, shape index: {}]
  %s14 = inlined_call_operand.vmem [shape: f32[256,512], index: 14, kind: input, shape index: {}]
  %s15 = inlined_call_operand.vmem [shape: f32[1,512], index: 15, kind: input, shape index: {}]
  %s16 = inlined_call_operand.vmem [shape: f32[512,128], index: 16, kind: input, shape index: {}]
  %s17 = inlined_call_operand.vmem [shape: f32[1,128], index: 17, kind: input, shape index: {}]
  %s18 = inlined_call_operand.vmem [shape: f32[128,128], index: 18, kind: input, shape index: {}]
  %s19 = inlined_call_operand.vmem [shape: f32[1,128], index: 19, kind: input, shape index: {}]
  %s20 = inlined_call_operand.vmem [shape: f32[2,4,128], index: 20, kind: output, shape index: {}]
  %s21 = sld [smem:[#allocation0]]
  $region113: #{stock_cnn_forward.1} parent=0
    _
  %s23 = ssub.s32 1, %s21
  %s24 = scalar_select 0, %s23, %s21
  loop: start=0, step=1, limit=4
  $region2: #{stock_cnn_forward.1} parent=0 // loop_pre_header
    _
  $region3: #{stock_cnn_forward.1} parent=0 // loop_header
    %s26 = sphi 0, %s30
    %p27 = scmp.ge.s32.totalorder %s26, 4
    %s36 = sphi 0, %s38
    %s39 = sphi 0, %s36
    %s40 = sphi 0, %s39
    %s56 = sphi 0, %s40
    %s60 = sphi 0, %s60
    %s62 = sphi 0, %s60
    %s63 = sphi 0, %s62
    %s77 = sphi 0, %s63
    %s81 = sphi 0, %s81
    %s83 = sphi 0, %s81
    %s84 = sphi 0, %s83
    %s98 = sphi 0, %s84
    %s102 = sphi 0, %s102
    %s104 = sphi 0, %s102
    %s105 = sphi 0, %s104
    %s119 = sphi 0, %s105
    %s123 = sphi 0, %s123
    %s125 = sphi 0, %s123
    %s126 = sphi 0, %s125
    %s140 = sphi 0, %s126
    %s144 = sphi 0, %s144
    %s146 = sphi 0, %s144
    %s147 = sphi 0, %s146
    %s161 = sphi 0, %s147
    %s165 = sphi 0, %s165
    %s167 = sphi 0, %s165
    %s168 = sphi 0, %s167
    %s182 = sphi 0, %s168
    %s186 = sphi 0, %s186
    %s188 = sphi 0, %s186
    %s189 = sphi 0, %s188
    %s203 = sphi 0, %s189
    %s207 = sphi 0, %s207
    %s209 = sphi 0, %s207
    %s210 = sphi 0, %s209
    %s224 = sphi 0, %s210
    %s228 = sphi 0, %s228
    %s230 = sphi 0, %s228
    %s231 = sphi 0, %s230
    %s245 = sphi 0, %s231
    %s249 = sphi 0, %s249
    %s251 = sphi 0, %s249
    %s252 = sphi 0, %s251
    %s266 = sphi 0, %s252
    %s270 = sphi 0, %s270
    %s272 = sphi 0, %s270
    %s273 = sphi 0, %s272
    %s287 = sphi 0, %s273
    %s291 = sphi 0, %s291
    %s293 = sphi 0, %s291
    %s294 = sphi 0, %s293
    %s308 = sphi 0, %s294
    %s312 = sphi 0, %s312
    %s314 = sphi 0, %s312
    %s315 = sphi 0, %s314
    %s329 = sphi 0, %s315
    %s333 = sphi 0, %s333
    %s335 = sphi 0, %s333
    %s336 = sphi 0, %s335
    %s350 = sphi 0, %s336
    %s354 = sphi 0, %s354
    %s356 = sphi 0, %s354
    %s357 = sphi 0, %s356
    %s371 = sphi 0, %s357
    %s375 = sphi 0, %s375
    %s377 = sphi 0, %s375
    %s378 = sphi 0, %s377
    %s392 = sphi 0, %s378
    %s396 = sphi 0, %s396
    %s398 = sphi 0, %s396
    %s399 = sphi 0, %s398
    %s413 = sphi 0, %s399
    %s417 = sphi 0, %s417
    %s419 = sphi 0, %s417
    %s420 = sphi 0, %s419
    %s434 = sphi 0, %s420
    %s438 = sphi 0, %s438
    %s440 = sphi 0, %s438
    %s441 = sphi 0, %s440
    %s455 = sphi 0, %s441
    %s461 = sphi 0, %s463
    %s464 = sphi 0, %s461
    %s465 = sphi 0, %s464
    %s481 = sphi 0, %s465
  $region4: #{stock_cnn_forward.1} parent=0 // loop_header_branch
    %29 = sbr.rel (%p27) target = $region8
  $region5: #{stock_cnn_forward.1} parent=0 // loop_body
    %s31 = ssub.s32 %s26, 1
    %s32 = ssub.s32 %s26, 2
    %s33 = sadd.s32 %s26, 1
    %s34 = ssub.s32 %s26, %s33
    %p35 = scmp.eq.s32.totalorder %s34, 0
    %s37 = sadd.s32 %s36, 1
    %s38 = scalar_select %p35, %s36, %s37
    %p41 = pneg %p35
    %p42 = scmp.eq.s32.totalorder %s26, 1
    %p43 = por %p41, %p42
    %p44 = scmp.ne.s32.totalorder %s36, %s39
    %p45 = scmp.eq.s32.totalorder %s26, 0
    %p46 = por %p44, %p45
    %p47 = scmp.ne.s32.totalorder %s36, %s39
    %p48 = scmp.eq.s32.totalorder %s31, 1
    %p49 = por %p47, %p48
    %p50 = scmp.ne.s32.totalorder %s39, %s40
    %p51 = scmp.eq.s32.totalorder %s31, 0
    %p52 = por %p50, %p51
    %p53 = scmp.ne.s32.totalorder %s39, %s40
    %p54 = scmp.eq.s32.totalorder %s32, 1
    %p55 = por %p53, %p54
    %p57 = scmp.ne.s32.totalorder %s40, %s56
    %p58 = scmp.eq.s32.totalorder %s32, 0
    %p59 = por %p57, %p58
    %s61 = sadd.s32 %s60, 1
    %p64 = scmp.eq.s32.totalorder %s26, 1
    %p65 = scmp.ne.s32.totalorder %s60, %s62
    %p66 = scmp.eq.s32.totalorder %s26, 0
    %p67 = por %p65, %p66
    %p68 = scmp.ne.s32.totalorder %s60, %s62
    %p69 = scmp.eq.s32.totalorder %s31, 1
    %p70 = por %p68, %p69
    %p71 = scmp.ne.s32.totalorder %s62, %s63
    %p72 = scmp.eq.s32.totalorder %s31, 0
    %p73 = por %p71, %p72
    %p74 = scmp.ne.s32.totalorder %s62, %s63
    %p75 = scmp.eq.s32.totalorder %s32, 1
    %p76 = por %p74, %p75
    %p78 = scmp.ne.s32.totalorder %s63, %s77
    %p79 = scmp.eq.s32.totalorder %s32, 0
    %p80 = por %p78, %p79
    %s82 = sadd.s32 %s81, 1
    %p85 = scmp.eq.s32.totalorder %s26, 1
    %p86 = scmp.ne.s32.totalorder %s81, %s83
    %p87 = scmp.eq.s32.totalorder %s26, 0
    %p88 = por %p86, %p87
    %p89 = scmp.ne.s32.totalorder %s81, %s83
    %p90 = scmp.eq.s32.totalorder %s31, 1
    %p91 = por %p89, %p90
    %p92 = scmp.ne.s32.totalorder %s83, %s84
    %p93 = scmp.eq.s32.totalorder %s31, 0
    %p94 = por %p92, %p93
    %p95 = scmp.ne.s32.totalorder %s83, %s84
    %p96 = scmp.eq.s32.totalorder %s32, 1
    %p97 = por %p95, %p96
    %p99 = scmp.ne.s32.totalorder %s84, %s98
    %p100 = scmp.eq.s32.totalorder %s32, 0
    %p101 = por %p99, %p100
    %s103 = sadd.s32 %s102, 1
    %p106 = scmp.eq.s32.totalorder %s26, 1
    %p107 = scmp.ne.s32.totalorder %s102, %s104
    %p108 = scmp.eq.s32.totalorder %s26, 0
    %p109 = por %p107, %p108
    %p110 = scmp.ne.s32.totalorder %s102, %s104
    %p111 = scmp.eq.s32.totalorder %s31, 1
    %p112 = por %p110, %p111
    %p113 = scmp.ne.s32.totalorder %s104, %s105
    %p114 = scmp.eq.s32.totalorder %s31, 0
    %p115 = por %p113, %p114
    %p116 = scmp.ne.s32.totalorder %s104, %s105
    %p117 = scmp.eq.s32.totalorder %s32, 1
    %p118 = por %p116, %p117
    %p120 = scmp.ne.s32.totalorder %s105, %s119
    %p121 = scmp.eq.s32.totalorder %s32, 0
    %p122 = por %p120, %p121
    %s124 = sadd.s32 %s123, 1
    %p127 = scmp.eq.s32.totalorder %s26, 1
    %p128 = scmp.ne.s32.totalorder %s123, %s125
    %p129 = scmp.eq.s32.totalorder %s26, 0
    %p130 = por %p128, %p129
    %p131 = scmp.ne.s32.totalorder %s123, %s125
    %p132 = scmp.eq.s32.totalorder %s31, 1
    %p133 = por %p131, %p132
    %p134 = scmp.ne.s32.totalorder %s125, %s126
    %p135 = scmp.eq.s32.totalorder %s31, 0
    %p136 = por %p134, %p135
    %p137 = scmp.ne.s32.totalorder %s125, %s126
    %p138 = scmp.eq.s32.totalorder %s32, 1
    %p139 = por %p137, %p138
    %p141 = scmp.ne.s32.totalorder %s126, %s140
    %p142 = scmp.eq.s32.totalorder %s32, 0
    %p143 = por %p141, %p142
    %s145 = sadd.s32 %s144, 1
    %p148 = scmp.eq.s32.totalorder %s26, 1
    %p149 = scmp.ne.s32.totalorder %s144, %s146
    %p150 = scmp.eq.s32.totalorder %s26, 0
    %p151 = por %p149, %p150
    %p152 = scmp.ne.s32.totalorder %s144, %s146
    %p153 = scmp.eq.s32.totalorder %s31, 1
    %p154 = por %p152, %p153
    %p155 = scmp.ne.s32.totalorder %s146, %s147
    %p156 = scmp.eq.s32.totalorder %s31, 0
    %p157 = por %p155, %p156
    %p158 = scmp.ne.s32.totalorder %s146, %s147
    %p159 = scmp.eq.s32.totalorder %s32, 1
    %p160 = por %p158, %p159
    %p162 = scmp.ne.s32.totalorder %s147, %s161
    %p163 = scmp.eq.s32.totalorder %s32, 0
    %p164 = por %p162, %p163
    %s166 = sadd.s32 %s165, 1
    %p169 = scmp.eq.s32.totalorder %s26, 1
    %p170 = scmp.ne.s32.totalorder %s165, %s167
    %p171 = scmp.eq.s32.totalorder %s26, 0
    %p172 = por %p170, %p171
    %p173 = scmp.ne.s32.totalorder %s165, %s167
    %p174 = scmp.eq.s32.totalorder %s31, 1
    %p175 = por %p173, %p174
    %p176 = scmp.ne.s32.totalorder %s167, %s168
    %p177 = scmp.eq.s32.totalorder %s31, 0
    %p178 = por %p176, %p177
    %p179 = scmp.ne.s32.totalorder %s167, %s168
    %p180 = scmp.eq.s32.totalorder %s32, 1
    %p181 = por %p179, %p180
    %p183 = scmp.ne.s32.totalorder %s168, %s182
    %p184 = scmp.eq.s32.totalorder %s32, 0
    %p185 = por %p183, %p184
    %s187 = sadd.s32 %s186, 1
    %p190 = scmp.eq.s32.totalorder %s26, 1
    %p191 = scmp.ne.s32.totalorder %s186, %s188
    %p192 = scmp.eq.s32.totalorder %s26, 0
    %p193 = por %p191, %p192
    %p194 = scmp.ne.s32.totalorder %s186, %s188
    %p195 = scmp.eq.s32.totalorder %s31, 1
    %p196 = por %p194, %p195
    %p197 = scmp.ne.s32.totalorder %s188, %s189
    %p198 = scmp.eq.s32.totalorder %s31, 0
    %p199 = por %p197, %p198
    %p200 = scmp.ne.s32.totalorder %s188, %s189
    %p201 = scmp.eq.s32.totalorder %s32, 1
    %p202 = por %p200, %p201
    %p204 = scmp.ne.s32.totalorder %s189, %s203
    %p205 = scmp.eq.s32.totalorder %s32, 0
    %p206 = por %p204, %p205
    %s208 = sadd.s32 %s207, 1
    %p211 = scmp.eq.s32.totalorder %s26, 1
    %p212 = scmp.ne.s32.totalorder %s207, %s209
    %p213 = scmp.eq.s32.totalorder %s26, 0
    %p214 = por %p212, %p213
    %p215 = scmp.ne.s32.totalorder %s207, %s209
    %p216 = scmp.eq.s32.totalorder %s31, 1
    %p217 = por %p215, %p216
    %p218 = scmp.ne.s32.totalorder %s209, %s210
    %p219 = scmp.eq.s32.totalorder %s31, 0
    %p220 = por %p218, %p219
    %p221 = scmp.ne.s32.totalorder %s209, %s210
    %p222 = scmp.eq.s32.totalorder %s32, 1
    %p223 = por %p221, %p222
    %p225 = scmp.ne.s32.totalorder %s210, %s224
    %p226 = scmp.eq.s32.totalorder %s32, 0
    %p227 = por %p225, %p226
    %s229 = sadd.s32 %s228, 1
    %p232 = scmp.eq.s32.totalorder %s26, 1
    %p233 = scmp.ne.s32.totalorder %s228, %s230
    %p234 = scmp.eq.s32.totalorder %s26, 0
    %p235 = por %p233, %p234
    %p236 = scmp.ne.s32.totalorder %s228, %s230
    %p237 = scmp.eq.s32.totalorder %s31, 1
    %p238 = por %p236, %p237
    %p239 = scmp.ne.s32.totalorder %s230, %s231
    %p240 = scmp.eq.s32.totalorder %s31, 0
    %p241 = por %p239, %p240
    %p242 = scmp.ne.s32.totalorder %s230, %s231
    %p243 = scmp.eq.s32.totalorder %s32, 1
    %p244 = por %p242, %p243
    %p246 = scmp.ne.s32.totalorder %s231, %s245
    %p247 = scmp.eq.s32.totalorder %s32, 0
    %p248 = por %p246, %p247
    %s250 = sadd.s32 %s249, 1
    %p253 = scmp.eq.s32.totalorder %s26, 1
    %p254 = scmp.ne.s32.totalorder %s249, %s251
    %p255 = scmp.eq.s32.totalorder %s26, 0
    %p256 = por %p254, %p255
    %p257 = scmp.ne.s32.totalorder %s249, %s251
    %p258 = scmp.eq.s32.totalorder %s31, 1
    %p259 = por %p257, %p258
    %p260 = scmp.ne.s32.totalorder %s251, %s252
    %p261 = scmp.eq.s32.totalorder %s31, 0
    %p262 = por %p260, %p261
    %p263 = scmp.ne.s32.totalorder %s251, %s252
    %p264 = scmp.eq.s32.totalorder %s32, 1
    %p265 = por %p263, %p264
    %p267 = scmp.ne.s32.totalorder %s252, %s266
    %p268 = scmp.eq.s32.totalorder %s32, 0
    %p269 = por %p267, %p268
    %s271 = sadd.s32 %s270, 1
    %p274 = scmp.eq.s32.totalorder %s26, 1
    %p275 = scmp.ne.s32.totalorder %s270, %s272
    %p276 = scmp.eq.s32.totalorder %s26, 0
    %p277 = por %p275, %p276
    %p278 = scmp.ne.s32.totalorder %s270, %s272
    %p279 = scmp.eq.s32.totalorder %s31, 1
    %p280 = por %p278, %p279
    %p281 = scmp.ne.s32.totalorder %s272, %s273
    %p282 = scmp.eq.s32.totalorder %s31, 0
    %p283 = por %p281, %p282
    %p284 = scmp.ne.s32.totalorder %s272, %s273
    %p285 = scmp.eq.s32.totalorder %s32, 1
    %p286 = por %p284, %p285
    %p288 = scmp.ne.s32.totalorder %s273, %s287
    %p289 = scmp.eq.s32.totalorder %s32, 0
    %p290 = por %p288, %p289
    %s292 = sadd.s32 %s291, 1
    %p295 = scmp.eq.s32.totalorder %s26, 1
    %p296 = scmp.ne.s32.totalorder %s291, %s293
    %p297 = scmp.eq.s32.totalorder %s26, 0
    %p298 = por %p296, %p297
    %p299 = scmp.ne.s32.totalorder %s291, %s293
    %p300 = scmp.eq.s32.totalorder %s31, 1
    %p301 = por %p299, %p300
    %p302 = scmp.ne.s32.totalorder %s293, %s294
    %p303 = scmp.eq.s32.totalorder %s31, 0
    %p304 = por %p302, %p303
    %p305 = scmp.ne.s32.totalorder %s293, %s294
    %p306 = scmp.eq.s32.totalorder %s32, 1
    %p307 = por %p305, %p306
    %p309 = scmp.ne.s32.totalorder %s294, %s308
    %p310 = scmp.eq.s32.totalorder %s32, 0
    %p311 = por %p309, %p310
    %s313 = sadd.s32 %s312, 1
    %p316 = scmp.eq.s32.totalorder %s26, 1
    %p317 = scmp.ne.s32.totalorder %s312, %s314
    %p318 = scmp.eq.s32.totalorder %s26, 0
    %p319 = por %p317, %p318
    %p320 = scmp.ne.s32.totalorder %s312, %s314
    %p321 = scmp.eq.s32.totalorder %s31, 1
    %p322 = por %p320, %p321
    %p323 = scmp.ne.s32.totalorder %s314, %s315
    %p324 = scmp.eq.s32.totalorder %s31, 0
    %p325 = por %p323, %p324
    %p326 = scmp.ne.s32.totalorder %s314, %s315
    %p327 = scmp.eq.s32.totalorder %s32, 1
    %p328 = por %p326, %p327
    %p330 = scmp.ne.s32.totalorder %s315, %s329
    %p331 = scmp.eq.s32.totalorder %s32, 0
    %p332 = por %p330, %p331
    %s334 = sadd.s32 %s333, 1
    %p337 = scmp.eq.s32.totalorder %s26, 1
    %p338 = scmp.ne.s32.totalorder %s333, %s335
    %p339 = scmp.eq.s32.totalorder %s26, 0
    %p340 = por %p338, %p339
    %p341 = scmp.ne.s32.totalorder %s333, %s335
    %p342 = scmp.eq.s32.totalorder %s31, 1
    %p343 = por %p341, %p342
    %p344 = scmp.ne.s32.totalorder %s335, %s336
    %p345 = scmp.eq.s32.totalorder %s31, 0
    %p346 = por %p344, %p345
    %p347 = scmp.ne.s32.totalorder %s335, %s336
    %p348 = scmp.eq.s32.totalorder %s32, 1
    %p349 = por %p347, %p348
    %p351 = scmp.ne.s32.totalorder %s336, %s350
    %p352 = scmp.eq.s32.totalorder %s32, 0
    %p353 = por %p351, %p352
    %s355 = sadd.s32 %s354, 1
    %p358 = scmp.eq.s32.totalorder %s26, 1
    %p359 = scmp.ne.s32.totalorder %s354, %s356
    %p360 = scmp.eq.s32.totalorder %s26, 0
    %p361 = por %p359, %p360
    %p362 = scmp.ne.s32.totalorder %s354, %s356
    %p363 = scmp.eq.s32.totalorder %s31, 1
    %p364 = por %p362, %p363
    %p365 = scmp.ne.s32.totalorder %s356, %s357
    %p366 = scmp.eq.s32.totalorder %s31, 0
    %p367 = por %p365, %p366
    %p368 = scmp.ne.s32.totalorder %s356, %s357
    %p369 = scmp.eq.s32.totalorder %s32, 1
    %p370 = por %p368, %p369
    %p372 = scmp.ne.s32.totalorder %s357, %s371
    %p373 = scmp.eq.s32.totalorder %s32, 0
    %p374 = por %p372, %p373
    %s376 = sadd.s32 %s375, 1
    %p379 = scmp.eq.s32.totalorder %s26, 1
    %p380 = scmp.ne.s32.totalorder %s375, %s377
    %p381 = scmp.eq.s32.totalorder %s26, 0
    %p382 = por %p380, %p381
    %p383 = scmp.ne.s32.totalorder %s375, %s377
    %p384 = scmp.eq.s32.totalorder %s31, 1
    %p385 = por %p383, %p384
    %p386 = scmp.ne.s32.totalorder %s377, %s378
    %p387 = scmp.eq.s32.totalorder %s31, 0
    %p388 = por %p386, %p387
    %p389 = scmp.ne.s32.totalorder %s377, %s378
    %p390 = scmp.eq.s32.totalorder %s32, 1
    %p391 = por %p389, %p390
    %p393 = scmp.ne.s32.totalorder %s378, %s392
    %p394 = scmp.eq.s32.totalorder %s32, 0
    %p395 = por %p393, %p394
    %s397 = sadd.s32 %s396, 1
    %p400 = scmp.eq.s32.totalorder %s26, 1
    %p401 = scmp.ne.s32.totalorder %s396, %s398
    %p402 = scmp.eq.s32.totalorder %s26, 0
    %p403 = por %p401, %p402
    %p404 = scmp.ne.s32.totalorder %s396, %s398
    %p405 = scmp.eq.s32.totalorder %s31, 1
    %p406 = por %p404, %p405
    %p407 = scmp.ne.s32.totalorder %s398, %s399
    %p408 = scmp.eq.s32.totalorder %s31, 0
    %p409 = por %p407, %p408
    %p410 = scmp.ne.s32.totalorder %s398, %s399
    %p411 = scmp.eq.s32.totalorder %s32, 1
    %p412 = por %p410, %p411
    %p414 = scmp.ne.s32.totalorder %s399, %s413
    %p415 = scmp.eq.s32.totalorder %s32, 0
    %p416 = por %p414, %p415
    %s418 = sadd.s32 %s417, 1
    %p421 = scmp.eq.s32.totalorder %s26, 1
    %p422 = scmp.ne.s32.totalorder %s417, %s419
    %p423 = scmp.eq.s32.totalorder %s26, 0
    %p424 = por %p422, %p423
    %p425 = scmp.ne.s32.totalorder %s417, %s419
    %p426 = scmp.eq.s32.totalorder %s31, 1
    %p427 = por %p425, %p426
    %p428 = scmp.ne.s32.totalorder %s419, %s420
    %p429 = scmp.eq.s32.totalorder %s31, 0
    %p430 = por %p428, %p429
    %p431 = scmp.ne.s32.totalorder %s419, %s420
    %p432 = scmp.eq.s32.totalorder %s32, 1
    %p433 = por %p431, %p432
    %p435 = scmp.ne.s32.totalorder %s420, %s434
    %p436 = scmp.eq.s32.totalorder %s32, 0
    %p437 = por %p435, %p436
    %s439 = sadd.s32 %s438, 1
    %p442 = scmp.eq.s32.totalorder %s26, 1
    %p443 = scmp.ne.s32.totalorder %s438, %s440
    %p444 = scmp.eq.s32.totalorder %s26, 0
    %p445 = por %p443, %p444
    %p446 = scmp.ne.s32.totalorder %s438, %s440
    %p447 = scmp.eq.s32.totalorder %s31, 1
    %p448 = por %p446, %p447
    %p449 = scmp.ne.s32.totalorder %s440, %s441
    %p450 = scmp.eq.s32.totalorder %s31, 0
    %p451 = por %p449, %p450
    %p452 = scmp.ne.s32.totalorder %s440, %s441
    %p453 = scmp.eq.s32.totalorder %s32, 1
    %p454 = por %p452, %p453
    %p456 = scmp.ne.s32.totalorder %s441, %s455
    %p457 = scmp.eq.s32.totalorder %s32, 0
    %p458 = por %p456, %p457
    %s459 = ssub.s32 %s26, %s33
    %p460 = scmp.eq.s32.totalorder %s459, 0
    %s462 = sadd.s32 %s461, 1
    %s463 = scalar_select %p460, %s461, %s462
    %p466 = pneg %p460
    %p467 = scmp.eq.s32.totalorder %s26, 1
    %p468 = por %p466, %p467
    %p469 = scmp.ne.s32.totalorder %s461, %s464
    %p470 = scmp.eq.s32.totalorder %s26, 0
    %p471 = por %p469, %p470
    %p472 = scmp.ne.s32.totalorder %s461, %s464
    %p473 = scmp.eq.s32.totalorder %s31, 1
    %p474 = por %p472, %p473
    %p475 = scmp.ne.s32.totalorder %s464, %s465
    %p476 = scmp.eq.s32.totalorder %s31, 0
    %p477 = por %p475, %p476
    %p478 = scmp.ne.s32.totalorder %s464, %s465
    %p479 = scmp.eq.s32.totalorder %s32, 1
    %p480 = por %p478, %p479
    %p482 = scmp.ne.s32.totalorder %s465, %s481
    %p483 = scmp.eq.s32.totalorder %s32, 0
    %p484 = por %p482, %p483
    %p485 = scmp.le.s32.totalorder 1, %s26
    %p486 = scmp.lt.s32.totalorder %s26, 3
    %p487 = pnand %p485, %p486
    %p488 = pneg %p487
    // Predicated region
    $region9: #{stock_cnn_forward.1} parent=5 // pred_check
      _
    $region10: #{stock_cnn_forward.1} parent=5 // pred_check_branch
      %490 = sbr.rel (%p487) target = $region12
    $region11: #{stock_cnn_forward.1} parent=5 // pred_region
      %s491 = ssub.s32 %s26, 1
      // Predicated region
      $region13: #{stock_cnn_forward.1} parent=11 // pred_check
        %p492 = pneg %p73
      $region14: #{stock_cnn_forward.1} parent=11 // pred_check_branch
        %494 = sbr.rel (%p492) target = $region16
      $region15: #{stock_cnn_forward.1} parent=11 // pred_region
        _
      $region16: #{stock_cnn_forward.1} parent=11 // pred_fallthru
        _
      // Predicated region
      $region17: #{stock_cnn_forward.1} parent=11 // pred_check
        %p495 = pneg %p94
      $region18: #{stock_cnn_forward.1} parent=11 // pred_check_branch
        %497 = sbr.rel (%p495) target = $region20
      $region19: #{stock_cnn_forward.1} parent=11 // pred_region
        _
      $region20: #{stock_cnn_forward.1} parent=11 // pred_fallthru
        _
      // Predicated region
      $region21: #{stock_cnn_forward.1} parent=11 // pred_check
        %p498 = pneg %p115
      $region22: #{stock_cnn_forward.1} parent=11 // pred_check_branch
        %500 = sbr.rel (%p498) target = $region24
      $region23: #{stock_cnn_forward.1} parent=11 // pred_region
        _
      $region24: #{stock_cnn_forward.1} parent=11 // pred_fallthru
        _
      // Predicated region
      $region25: #{stock_cnn_forward.1} parent=11 // pred_check
        %p501 = pneg %p136
      $region26: #{stock_cnn_forward.1} parent=11 // pred_check_branch
        %503 = sbr.rel (%p501) target = $region28
      $region27: #{stock_cnn_forward.1} parent=11 // pred_region
        _
      $region28: #{stock_cnn_forward.1} parent=11 // pred_fallthru
        _
      // Predicated region
      $region29: #{stock_cnn_forward.1} parent=11 // pred_check
        %p504 = pneg %p157
      $region30: #{stock_cnn_forward.1} parent=11 // pred_check_branch
        %506 = sbr.rel (%p504) target = $region32
      $region31: #{stock_cnn_forward.1} parent=11 // pred_region
        _
      $region32: #{stock_cnn_forward.1} parent=11 // pred_fallthru
        _
      // Predicated region
      $region33: #{stock_cnn_forward.1} parent=11 // pred_check
        %p507 = pneg %p178
      $region34: #{stock_cnn_forward.1} parent=11 // pred_check_branch
        %509 = sbr.rel (%p507) target = $region36
      $region35: #{stock_cnn_forward.1} parent=11 // pred_region
        _
      $region36: #{stock_cnn_forward.1} parent=11 // pred_fallthru
        _
      // Predicated region
      $region37: #{stock_cnn_forward.1} parent=11 // pred_check
        %p510 = pneg %p199
      $region38: #{stock_cnn_forward.1} parent=11 // pred_check_branch
        %512 = sbr.rel (%p510) target = $region40
      $region39: #{stock_cnn_forward.1} parent=11 // pred_region
        _
      $region40: #{stock_cnn_forward.1} parent=11 // pred_fallthru
        _
      // Predicated region
      $region41: #{stock_cnn_forward.1} parent=11 // pred_check
        %p513 = pneg %p220
      $region42: #{stock_cnn_forward.1} parent=11 // pred_check_branch
        %515 = sbr.rel (%p513) target = $region44
      $region43: #{stock_cnn_forward.1} parent=11 // pred_region
        _
      $region44: #{stock_cnn_forward.1} parent=11 // pred_fallthru
        _
      // Predicated region
      $region45: #{stock_cnn_forward.1} parent=11 // pred_check
        %p516 = pneg %p241
      $region46: #{stock_cnn_forward.1} parent=11 // pred_check_branch
        %518 = sbr.rel (%p516) target = $region48
      $region47: #{stock_cnn_forward.1} parent=11 // pred_region
        _
      $region48: #{stock_cnn_forward.1} parent=11 // pred_fallthru
        _
      // Predicated region
      $region49: #{stock_cnn_forward.1} parent=11 // pred_check
        %p519 = pneg %p262
      $region50: #{stock_cnn_forward.1} parent=11 // pred_check_branch
        %521 = sbr.rel (%p519) target = $region52
      $region51: #{stock_cnn_forward.1} parent=11 // pred_region
        _
      $region52: #{stock_cnn_forward.1} parent=11 // pred_fallthru
        _
      // Predicated region
      $region53: #{stock_cnn_forward.1} parent=11 // pred_check
        %p522 = pneg %p283
      $region54: #{stock_cnn_forward.1} parent=11 // pred_check_branch
        %524 = sbr.rel (%p522) target = $region56
      $region55: #{stock_cnn_forward.1} parent=11 // pred_region
        _
      $region56: #{stock_cnn_forward.1} parent=11 // pred_fallthru
        _
      // Predicated region
      $region57: #{stock_cnn_forward.1} parent=11 // pred_check
        %p525 = pneg %p304
      $region58: #{stock_cnn_forward.1} parent=11 // pred_check_branch
        %527 = sbr.rel (%p525) target = $region60
      $region59: #{stock_cnn_forward.1} parent=11 // pred_region
        _
      $region60: #{stock_cnn_forward.1} parent=11 // pred_fallthru
        _
      // Predicated region
      $region61: #{stock_cnn_forward.1} parent=11 // pred_check
        %p528 = pneg %p325
      $region62: #{stock_cnn_forward.1} parent=11 // pred_check_branch
        %530 = sbr.rel (%p528) target = $region64
      $region63: #{stock_cnn_forward.1} parent=11 // pred_region
        _
      $region64: #{stock_cnn_forward.1} parent=11 // pred_fallthru
        _
      // Predicated region
      $region65: #{stock_cnn_forward.1} parent=11 // pred_check
        %p531 = pneg %p346
      $region66: #{stock_cnn_forward.1} parent=11 // pred_check_branch
        %533 = sbr.rel (%p531) target = $region68
      $region67: #{stock_cnn_forward.1} parent=11 // pred_region
        _
      $region68: #{stock_cnn_forward.1} parent=11 // pred_fallthru
        _
      // Predicated region
      $region69: #{stock_cnn_forward.1} parent=11 // pred_check
        %p534 = pneg %p367
      $region70: #{stock_cnn_forward.1} parent=11 // pred_check_branch
        %536 = sbr.rel (%p534) target = $region72
      $region71: #{stock_cnn_forward.1} parent=11 // pred_region
        _
      $region72: #{stock_cnn_forward.1} parent=11 // pred_fallthru
        _
      // Predicated region
      $region73: #{stock_cnn_forward.1} parent=11 // pred_check
        %p537 = pneg %p388
      $region74: #{stock_cnn_forward.1} parent=11 // pred_check_branch
        %539 = sbr.rel (%p537) target = $region76
      $region75: #{stock_cnn_forward.1} parent=11 // pred_region
        _
      $region76: #{stock_cnn_forward.1} parent=11 // pred_fallthru
        _
      // Predicated region
      $region77: #{stock_cnn_forward.1} parent=11 // pred_check
        %p540 = pneg %p409
      $region78: #{stock_cnn_forward.1} parent=11 // pred_check_branch
        %542 = sbr.rel (%p540) target = $region80
      $region79: #{stock_cnn_forward.1} parent=11 // pred_region
        _
      $region80: #{stock_cnn_forward.1} parent=11 // pred_fallthru
        _
      // Predicated region
      $region81: #{stock_cnn_forward.1} parent=11 // pred_check
        %p543 = pneg %p430
      $region82: #{stock_cnn_forward.1} parent=11 // pred_check_branch
        %545 = sbr.rel (%p543) target = $region84
      $region83: #{stock_cnn_forward.1} parent=11 // pred_region
        _
      $region84: #{stock_cnn_forward.1} parent=11 // pred_fallthru
        _
      // Predicated region
      $region85: #{stock_cnn_forward.1} parent=11 // pred_check
        %p546 = pneg %p451
      $region86: #{stock_cnn_forward.1} parent=11 // pred_check_branch
        %548 = sbr.rel (%p546) target = $region88
      $region87: #{stock_cnn_forward.1} parent=11 // pred_region
        _
      $region88: #{stock_cnn_forward.1} parent=11 // pred_fallthru
        _
    $region12: #{stock_cnn_forward.1} parent=5 // pred_fallthru
      _
    %p549 = scmp.lt.s32.totalorder %s26, 2
    // Predicated region
    $region89: #{stock_cnn_forward.1} parent=5 // pred_check
      %p550 = pneg %p549
    $region90: #{stock_cnn_forward.1} parent=5 // pred_check_branch
      %552 = sbr.rel (%p550) target = $region92
    $region91: #{stock_cnn_forward.1} parent=5 // pred_region
      // Predicated region
      $region93: #{stock_cnn_forward.1} parent=91 // pred_check
        %p553 = pneg %p46
      $region94: #{stock_cnn_forward.1} parent=91 // pred_check_branch
        %555 = sbr.rel (%p553) target = $region96
      $region95: #{stock_cnn_forward.1} parent=91 // pred_region
        %p556 = scmp.lt.s32.totalorder %s26, 1
        %s557 = scalar_select %p556, %s26, 1
        %s558 = smul.addr %s557, 8
        %s559 = smul.addr %s558, 8
        %s560 = scalar_lea.vmem %s0, %s559
      $region96: #{stock_cnn_forward.1} parent=91 // pred_fallthru
        _
    $region92: #{stock_cnn_forward.1} parent=5 // pred_fallthru
      _
    %p561 = scmp.le.s32.totalorder 1, %s26
    %p562 = scmp.lt.s32.totalorder %s26, 3
    %p563 = pnand %p561, %p562
    %p564 = pneg %p563
    // Predicated region
    $region97: #{stock_cnn_forward.1} parent=5 // pred_check
      _
    $region98: #{stock_cnn_forward.1} parent=5 // pred_check_branch
      %566 = sbr.rel (%p563) target = $region100
    $region99: #{stock_cnn_forward.1} parent=5 // pred_region
      %s567 = ssub.s32 %s26, 1
      %p568 = scmp.lt.s32.totalorder %s31, 1
      %s569 = scalar_select %p568, %s31, 1
      %s570 = smul.addr %s569, 8
      %s571 = smul.addr %s570, 8
      %s572 = scalar_lea.vmem %s0, %s571
      %p573 = pneg %p52
      %p574 = pneg %p49
      %p575 = pneg %p73
      %p576 = pneg %p70
      %p577 = pneg %p94
      %p578 = pneg %p91
      %p579 = pneg %p115
      %p580 = pneg %p112
      %p581 = pneg %p136
      %p582 = pneg %p133
      %p583 = pneg %p157
      %p584 = pneg %p154
      %p585 = pneg %p178
      %p586 = pneg %p175
      %p587 = pneg %p199
      %p588 = pneg %p196
      %p589 = pneg %p220
      %p590 = pneg %p217
      %p591 = pneg %p241
      %p592 = pneg %p238
      %p593 = pneg %p262
      %p594 = pneg %p259
      %p595 = pneg %p283
      %p596 = pneg %p280
      %p597 = pneg %p304
      %p598 = pneg %p301
      %p599 = pneg %p325
      %p600 = pneg %p322
      %p601 = pneg %p346
      %p602 = pneg %p343
      %p603 = pneg %p367
      %p604 = pneg %p364
      %p605 = pneg %p388
      %p606 = pneg %p385
      %p607 = pneg %p409
      %p608 = pneg %p406
      %p609 = pneg %p430
      %p610 = pneg %p427
      %p611 = pneg %p451
      %p612 = pneg %p448
      %p613 = pneg %p477
      %p614 = pneg %p474
      %p615 = scmp.lt.s32.totalorder %s31, 1
      %s616 = scalar_select %p615, %s31, 1
      %s617 = smul.addr %s616, 4
      %s618 = scalar_lea.vmem %s20, %s617
      %p619 = scmp.lt.s32.totalorder %s31, 1
      %s620 = scalar_select %p619, %s31, 1
      %s621 = smul.addr %s620, 8
      %s622 = smul.addr %s621, 8
      %s623 = scalar_lea.vmem %s0, %s622
      %p624 = scmp.lt.s32.totalorder %s31, 1
      %s625 = scalar_select %p624, %s31, 1
      %s626 = smul.addr %s625, 4
      %s627 = scalar_lea.vmem %s20, %s626
      %v628 = vld [vmem:[%s623] sm:$0xff]
      %v629 = vld [vmem:[%s623 + $0x8] sm:$0xff]
      %v630 = vld [vmem:[%s623 + $0x10] sm:$0xff]
      %v631 = vld [vmem:[%s623 + $0x18] sm:$0xff]
      %v632 = vld [vmem:[%s623 + $0x20] sm:$0xff]
      %v633 = vld [vmem:[%s623 + $0x28] sm:$0xff]
      %v634 = vld [vmem:[%s623 + $0x30] sm:$0xff]
      %v635 = vld [vmem:[%s623 + $0x38] sm:$0xff]
      %v636 = vld [vmem:[%s4] sm:$0xff]
      %vm637 = vcmask 64512
      %v639 = vsel %vm637, %v628, 0
      %v642 = vsel %vm637, %v629, 0
      %v645 = vsel %vm637, %v630, 0
      %v648 = vsel %vm637, %v631, 0
      %v651 = vsel %vm637, %v632, 0
      %v654 = vsel %vm637, %v633, 0
      %v657 = vsel %vm637, %v634, 0
      %v660 = vsel %vm637, %v635, 0
      %662 = vmatpush.msra.mxu0 0.0
      %663 = vmatpush.msra.mxu0 0.0
      %664 = vmatpush.msra.mxu0 0.0
      %665 = vmatpush.msra.mxu0 0.0
      %666 = vmatpush.msra.mxu0 0.0
      %667 = vmatpush.msra.mxu0 0.0
      %668 = vmatpush.msra.mxu0 0.0
      %669 = vmatpush.msra.mxu0 0.0
      %670 = vmatpush.msra.mxu0 0.0
      %671 = vmatpush.msra.mxu0 0.0
      %672 = vmatpush.msra.mxu0 0.0
      %673 = vmatpush.msra.mxu0 0.0
      %674 = vmatpush.msra.mxu0 0.0
      %675 = vmatpush.msra.mxu0 0.0
      %676 = vmatpush.msra.mxu0 0.0
      %677 = vmatpush.msra.mxu0 %v636
      %678 = vmatmul.f32.gmra.mxu0 %v639
      %v679 = vpop.f32.mrf.mxu0
      %v680 = vadd.f32 0.0, %v679
      %681 = vmatmul.f32.gmra.mxu0 %v642
      %v682 = vpop.f32.mrf.mxu0
      %v683 = vadd.f32 0.0, %v682
      %684 = vmatmul.f32.gmra.mxu0 %v645
      %v685 = vpop.f32.mrf.mxu0
      %v686 = vadd.f32 0.0, %v685
      %687 = vmatmul.f32.gmra.mxu0 %v648
      %v688 = vpop.f32.mrf.mxu0
      %v689 = vadd.f32 0.0, %v688
      %690 = vmatmul.f32.gmra.mxu0 %v651
      %v691 = vpop.f32.mrf.mxu0
      %v692 = vadd.f32 0.0, %v691
      %693 = vmatmul.f32.gmra.mxu0 %v654
      %v694 = vpop.f32.mrf.mxu0
      %v695 = vadd.f32 0.0, %v694
      %696 = vmatmul.f32.gmra.mxu0 %v657
      %v697 = vpop.f32.mrf.mxu0
      %v698 = vadd.f32 0.0, %v697
      %699 = vmatmul.f32.gmra.mxu0 %v660
      %v700 = vpop.f32.mrf.mxu0
      %v701 = vadd.f32 0.0, %v700
      %702 = vdwg.mxu0
      %v703 = vld [vmem:[%s5] sm:$0x1]
      %v704 = vld [vmem:[%s1] sm:$0xff]
      %v705 = vld [vmem:[%s1 + $0x8] sm:$0xff]
      %v706 = vld [vmem:[%s1 + $0x10] sm:$0xff]
      %v707 = vld [vmem:[%s1 + $0x18] sm:$0xff]
      %v708 = vld [vmem:[%s1 + $0x20] sm:$0xf]
      %v710 = vperm.slane %v703, 0
      %vm712 = vcmask 523264
      %v714 = vsel %vm712, %v704, 0
      %v717 = vsel %vm712, %v705, 0
      %v720 = vsel %vm712, %v706, 0
      %v723 = vsel %vm712, %v707, 0
      %v726 = vsel %vm712, %v708, 0
      %728 = vmatpush.msra.mxu0 0.0
      %729 = vmatpush.msra.mxu0 0.0
      %730 = vmatpush.msra.mxu0 0.0
      %731 = vmatpush.msra.mxu0 0.0
      %732 = vmatpush.msra.mxu0 0.0
      %733 = vmatpush.msra.mxu0 0.0
      %734 = vmatpush.msra.mxu0 0.0
      %735 = vmatpush.msra.mxu0 0.0
      %736 = vmatpush.msra.mxu0 %v701
      %737 = vmatpush.msra.mxu0 %v698
      %738 = vmatpush.msra.mxu0 %v695
      %739 = vmatpush.msra.mxu0 %v692
      %740 = vmatpush.msra.mxu0 %v689
      %741 = vmatpush.msra.mxu0 %v686
      %742 = vmatpush.msra.mxu0 %v683
      %743 = vmatpush.msra.mxu0 %v680
      %744 = vmatmul.f32.gmra.mxu0 %v714
      %v745 = vpop.f32.mrf.mxu0
      %v746 = vadd.f32 %v710, %v745
      %747 = vmatmul.f32.gmra.mxu0 %v717
      %v748 = vpop.f32.mrf.mxu0
      %v749 = vadd.f32 %v710, %v748
      %750 = vmatmul.f32.gmra.mxu0 %v720
      %v751 = vpop.f32.mrf.mxu0
      %v752 = vadd.f32 %v710, %v751
      %753 = vmatmul.f32.gmra.mxu0 %v723
      %v754 = vpop.f32.mrf.mxu0
      %v755 = vadd.f32 %v710, %v754
      %756 = vmatmul.f32.gmra.mxu0 %v726
      %v757 = vpop.f32.mrf.mxu0
      %v758 = vadd.f32 %v710, %v757
      %759 = vdwg.mxu0
      %v760 = vmax.f32 %v746, 0.0
      %v761 = vmax.f32 %v749, 0.0
      %v762 = vmax.f32 %v752, 0.0
      %v763 = vmax.f32 %v755, 0.0
      %v764 = vmax.f32 %v758, 0.0
      %s765 = scalar_lea.vmem %s1, 40
      %v766 = vld [vmem:[%s765] sm:$0xff]
      %v767 = vld [vmem:[%s765 + $0x8] sm:$0xff]
      %v768 = vld [vmem:[%s765 + $0x10] sm:$0xff]
      %v769 = vld [vmem:[%s765 + $0x18] sm:$0xff]
      %v770 = vld [vmem:[%s765 + $0x20] sm:$0xf]
      %v772 = vsel %vm712, %v766, 0
      %v775 = vsel %vm712, %v767, 0
      %v778 = vsel %vm712, %v768, 0
      %v781 = vsel %vm712, %v769, 0
      %v784 = vsel %vm712, %v770, 0
      %786 = vmatpush.msra.mxu0 0.0
      %787 = vmatpush.msra.mxu0 0.0
      %788 = vmatpush.msra.mxu0 0.0
      %789 = vmatpush.msra.mxu0 0.0
      %790 = vmatpush.msra.mxu0 0.0
      %791 = vmatpush.msra.mxu0 0.0
      %792 = vmatpush.msra.mxu0 0.0
      %793 = vmatpush.msra.mxu0 0.0
      %794 = vmatpush.msra.mxu0 %v701
      %795 = vmatpush.msra.mxu0 %v698
      %796 = vmatpush.msra.mxu0 %v695
      %797 = vmatpush.msra.mxu0 %v692
      %798 = vmatpush.msra.mxu0 %v689
      %799 = vmatpush.msra.mxu0 %v686
      %800 = vmatpush.msra.mxu0 %v683
      %801 = vmatpush.msra.mxu0 %v680
      %802 = vmatmul.f32.gmra.mxu0 %v772
      %v803 = vpop.f32.mrf.mxu0
      %v804 = vadd.f32 %v710, %v803
      %805 = vmatmul.f32.gmra.mxu0 %v775
      %v806 = vpop.f32.mrf.mxu0
      %v807 = vadd.f32 %v710, %v806
      %808 = vmatmul.f32.gmra.mxu0 %v778
      %v809 = vpop.f32.mrf.mxu0
      %v810 = vadd.f32 %v710, %v809
      %811 = vmatmul.f32.gmra.mxu0 %v781
      %v812 = vpop.f32.mrf.mxu0
      %v813 = vadd.f32 %v710, %v812
      %814 = vmatmul.f32.gmra.mxu0 %v784
      %v815 = vpop.f32.mrf.mxu0
      %v816 = vadd.f32 %v710, %v815
      %817 = vdwg.mxu0
      %v818 = vmax.f32 %v804, 0.0
      %v819 = vmax.f32 %v807, 0.0
      %v820 = vmax.f32 %v810, 0.0
      %v821 = vmax.f32 %v813, 0.0
      %v822 = vmax.f32 %v816, 0.0
      %v823 = vmax.f32 %v760, %v818
      %v824 = vmax.f32 %v761, %v819
      %v825 = vmax.f32 %v762, %v820
      %v826 = vmax.f32 %v763, %v821
      %v827 = vmax.f32 %v764, %v822
      %v828 = vld [vmem:[%s6] sm:$0xff]
      %v829 = vld [vmem:[%s6 + $0x8] sm:$0xff]
      %v830 = vld [vmem:[%s6 + $0x10] sm:$0xff]
      %v831 = vld [vmem:[%s6 + $0x18] sm:$0xff]
      %v832 = vld [vmem:[%s6 + $0x20] sm:$0xff]
      %v833 = vld [vmem:[%s6 + $0x28] sm:$0xff]
      %v834 = vld [vmem:[%s6 + $0x30] sm:$0xff]
      %v835 = vld [vmem:[%s6 + $0x38] sm:$0xff]
      %v837 = vsel %vm712, %v823, 0
      %v840 = vsel %vm712, %v824, 0
      %v843 = vsel %vm712, %v825, 0
      %v846 = vsel %vm712, %v826, 0
      %v849 = vsel %vm712, %v827, 0
      %851 = vmatpush.msra.mxu0 0.0
      %852 = vmatpush.msra.mxu0 0.0
      %853 = vmatpush.msra.mxu0 0.0
      %854 = vmatpush.msra.mxu0 0.0
      %855 = vmatpush.msra.mxu0 0.0
      %856 = vmatpush.msra.mxu0 0.0
      %857 = vmatpush.msra.mxu0 0.0
      %858 = vmatpush.msra.mxu0 0.0
      %859 = vmatpush.msra.mxu0 %v835
      %860 = vmatpush.msra.mxu0 %v834
      %861 = vmatpush.msra.mxu0 %v833
      %862 = vmatpush.msra.mxu0 %v832
      %863 = vmatpush.msra.mxu0 %v831
      %864 = vmatpush.msra.mxu0 %v830
      %865 = vmatpush.msra.mxu0 %v829
      %866 = vmatpush.msra.mxu0 %v828
      %867 = vmatmul.f32.gmra.mxu0 %v837
      %v868 = vpop.f32.mrf.mxu0
      %v869 = vadd.f32 0.0, %v868
      %870 = vmatmul.f32.gmra.mxu0 %v840
      %v871 = vpop.f32.mrf.mxu0
      %v872 = vadd.f32 0.0, %v871
      %873 = vmatmul.f32.gmra.mxu0 %v843
      %v874 = vpop.f32.mrf.mxu0
      %v875 = vadd.f32 0.0, %v874
      %876 = vmatmul.f32.gmra.mxu0 %v846
      %v877 = vpop.f32.mrf.mxu0
      %v878 = vadd.f32 0.0, %v877
      %879 = vmatmul.f32.gmra.mxu0 %v849
      %v880 = vpop.f32.mrf.mxu0
      %v881 = vadd.f32 0.0, %v880
      %882 = vdwg.mxu0
      %v883 = vld [vmem:[%s7] sm:$0x1]
      %v884 = vld [vmem:[%s2] sm:$0xff]
      %v885 = vld [vmem:[%s2 + $0x8] sm:$0xff]
      %v886 = vld [vmem:[%s2 + $0x10] sm:$0xf]
      %v888 = vperm.slane %v883, 0
      %vm890 = vcmask 293888
      %v892 = vsel %vm890, %v884, 0
      %v895 = vsel %vm890, %v885, 0
      %v898 = vsel %vm890, %v886, 0
      %vm900 = vcmask 1043456
      %v902 = vsel %vm900, %v881, 0
      %904 = vmatpush.msra.mxu0 0.0
      %905 = vmatpush.msra.mxu0 0.0
      %906 = vmatpush.msra.mxu0 0.0
      %907 = vmatpush.msra.mxu0 0.0
      %908 = vmatpush.msra.mxu0 0.0
      %909 = vmatpush.msra.mxu0 0.0
      %910 = vmatpush.msra.mxu0 0.0
      %911 = vmatpush.msra.mxu0 0.0
      %912 = vmatpush.msra.mxu0 0.0
      %913 = vmatpush.msra.mxu0 0.0
      %914 = vmatpush.msra.mxu0 0.0
      %915 = vmatpush.msra.mxu0 %v902
      %916 = vmatpush.msra.mxu0 %v878
      %917 = vmatpush.msra.mxu0 %v875
      %918 = vmatpush.msra.mxu0 %v872
      %919 = vmatpush.msra.mxu0 %v869
      %920 = vmatmul.f32.gmra.mxu0 %v892
      %v921 = vpop.f32.mrf.mxu0
      %v922 = vadd.f32 %v888, %v921
      %923 = vmatmul.f32.gmra.mxu0 %v895
      %v924 = vpop.f32.mrf.mxu0
      %v925 = vadd.f32 %v888, %v924
      %926 = vmatmul.f32.gmra.mxu0 %v898
      %v927 = vpop.f32.mrf.mxu0
      %v928 = vadd.f32 %v888, %v927
      %929 = vdwg.mxu0
      %v930 = vmax.f32 %v922, 0.0
      %v931 = vmax.f32 %v925, 0.0
      %v932 = vmax.f32 %v928, 0.0
      %s933 = scalar_lea.vmem %s2, 24
      %v934 = vld [vmem:[%s933] sm:$0xff]
      %v935 = vld [vmem:[%s933 + $0x8] sm:$0xff]
      %v936 = vld [vmem:[%s933 + $0x10] sm:$0xf]
      %v938 = vsel %vm890, %v934, 0
      %v941 = vsel %vm890, %v935, 0
      %v944 = vsel %vm890, %v936, 0
      %946 = vmatpush.msra.mxu0 0.0
      %947 = vmatpush.msra.mxu0 0.0
      %948 = vmatpush.msra.mxu0 0.0
      %949 = vmatpush.msra.mxu0 0.0
      %950 = vmatpush.msra.mxu0 0.0
      %951 = vmatpush.msra.mxu0 0.0
      %952 = vmatpush.msra.mxu0 0.0
      %953 = vmatpush.msra.mxu0 0.0
      %954 = vmatpush.msra.mxu0 0.0
      %955 = vmatpush.msra.mxu0 0.0
      %956 = vmatpush.msra.mxu0 0.0
      %957 = vmatpush.msra.mxu0 %v902
      %958 = vmatpush.msra.mxu0 %v878
      %959 = vmatpush.msra.mxu0 %v875
      %960 = vmatpush.msra.mxu0 %v872
      %961 = vmatpush.msra.mxu0 %v869
      %962 = vmatmul.f32.gmra.mxu0 %v938
      %v963 = vpop.f32.mrf.mxu0
      %v964 = vadd.f32 %v888, %v963
      %965 = vmatmul.f32.gmra.mxu0 %v941
      %v966 = vpop.f32.mrf.mxu0
      %v967 = vadd.f32 %v888, %v966
      %968 = vmatmul.f32.gmra.mxu0 %v944
      %v969 = vpop.f32.mrf.mxu0
      %v970 = vadd.f32 %v888, %v969
      %971 = vdwg.mxu0
      %v972 = vmax.f32 %v964, 0.0
      %v973 = vmax.f32 %v967, 0.0
      %v974 = vmax.f32 %v970, 0.0
      %v975 = vmax.f32 %v930, %v972
      %v976 = vmax.f32 %v931, %v973
      %v977 = vmax.f32 %v932, %v974
      %v978 = vld [vmem:[%s8] sm:$0xff]
      %v979 = vld [vmem:[%s8 + $0x8] sm:$0xff]
      %v980 = vld [vmem:[%s8 + $0x10] sm:$0xff]
      %v981 = vld [vmem:[%s8 + $0x18] sm:$0xff]
      %v982 = vld [vmem:[%s8 + $0x20] sm:$0xff]
      %v983 = vld [vmem:[%s8 + $0x28] sm:$0xff]
      %v984 = vld [vmem:[%s8 + $0x30] sm:$0xff]
      %v985 = vld [vmem:[%s8 + $0x38] sm:$0xff]
      %v986 = vld [vmem:[%s8 + $0x40] sm:$0xff]
      %v987 = vld [vmem:[%s8 + $0x48] sm:$0xff]
      %v988 = vld [vmem:[%s8 + $0x50] sm:$0xff]
      %v989 = vld [vmem:[%s8 + $0x58] sm:$0xff]
      %v990 = vld [vmem:[%s8 + $0x60] sm:$0xff]
      %v991 = vld [vmem:[%s8 + $0x68] sm:$0xff]
      %v992 = vld [vmem:[%s8 + $0x70] sm:$0xff]
      %v993 = vld [vmem:[%s8 + $0x78] sm:$0xff]
      %v994 = vld [vmem:[%s8 + $0x80] sm:$0xff]
      %v995 = vld [vmem:[%s8 + $0x88] sm:$0xff]
      %v996 = vld [vmem:[%s8 + $0x90] sm:$0xff]
      %v997 = vld [vmem:[%s8 + $0x98] sm:$0xff]
      %v998 = vld [vmem:[%s8 + $0xa0] sm:$0xff]
      %v999 = vld [vmem:[%s8 + $0xa8] sm:$0xff]
      %v1000 = vld [vmem:[%s8 + $0xb0] sm:$0xff]
      %v1001 = vld [vmem:[%s8 + $0xb8] sm:$0xff]
      %v1002 = vld [vmem:[%s8 + $0xc0] sm:$0xff]
      %v1003 = vld [vmem:[%s8 + $0xc8] sm:$0xff]
      %v1004 = vld [vmem:[%s8 + $0xd0] sm:$0xff]
      %v1005 = vld [vmem:[%s8 + $0xd8] sm:$0xff]
      %v1006 = vld [vmem:[%s8 + $0xe0] sm:$0xff]
      %v1007 = vld [vmem:[%s8 + $0xe8] sm:$0xff]
      %v1008 = vld [vmem:[%s8 + $0xf0] sm:$0xff]
      %v1009 = vld [vmem:[%s8 + $0xf8] sm:$0xff]
      %1010 = vmatpush.msra.mxu0 %v1008
      %1011 = vmatpush.msra.mxu0 %v1006
      %1012 = vmatpush.msra.mxu0 %v1004
      %1013 = vmatpush.msra.mxu0 %v1002
      %1014 = vmatpush.msra.mxu0 %v1000
      %1015 = vmatpush.msra.mxu0 %v998
      %1016 = vmatpush.msra.mxu0 %v996
      %1017 = vmatpush.msra.mxu0 %v994
      %1018 = vmatpush.msra.mxu0 %v992
      %1019 = vmatpush.msra.mxu0 %v990
      %1020 = vmatpush.msra.mxu0 %v988
      %1021 = vmatpush.msra.mxu0 %v986
      %1022 = vmatpush.msra.mxu0 %v984
      %1023 = vmatpush.msra.mxu0 %v982
      %1024 = vmatpush.msra.mxu0 %v980
      %1025 = vmatpush.msra.mxu0 %v978
      %1026 = vmatmul.f32.gmra.mxu0 %v975
      %v1027 = vpop.f32.mrf.mxu0
      %v1028 = vadd.f32 0.0, %v1027
      %1029 = vmatmul.f32.gmra.mxu0 %v976
      %v1030 = vpop.f32.mrf.mxu0
      %v1031 = vadd.f32 0.0, %v1030
      %1032 = vmatmul.f32.gmra.mxu0 %v977
      %v1033 = vpop.f32.mrf.mxu0
      %v1034 = vadd.f32 0.0, %v1033
      %1035 = vdwg.mxu0
      %1036 = vmatpush.msra.mxu0 %v1009
      %1037 = vmatpush.msra.mxu0 %v1007
      %1038 = vmatpush.msra.mxu0 %v1005
      %1039 = vmatpush.msra.mxu0 %v1003
      %1040 = vmatpush.msra.mxu0 %v1001
      %1041 = vmatpush.msra.mxu0 %v999
      %1042 = vmatpush.msra.mxu0 %v997
      %1043 = vmatpush.msra.mxu0 %v995
      %1044 = vmatpush.msra.mxu0 %v993
      %1045 = vmatpush.msra.mxu0 %v991
      %1046 = vmatpush.msra.mxu0 %v989
      %1047 = vmatpush.msra.mxu0 %v987
      %1048 = vmatpush.msra.mxu0 %v985
      %1049 = vmatpush.msra.mxu0 %v983
      %1050 = vmatpush.msra.mxu0 %v981
      %1051 = vmatpush.msra.mxu0 %v979
      %1052 = vmatmul.f32.gmra.mxu0 %v975
      %v1053 = vpop.f32.mrf.mxu0
      %v1054 = vadd.f32 0.0, %v1053
      %1055 = vmatmul.f32.gmra.mxu0 %v976
      %v1056 = vpop.f32.mrf.mxu0
      %v1057 = vadd.f32 0.0, %v1056
      %1058 = vmatmul.f32.gmra.mxu0 %v977
      %v1059 = vpop.f32.mrf.mxu0
      %v1060 = vadd.f32 0.0, %v1059
      %1061 = vdwg.mxu0
      %v1062 = vld [vmem:[%s9] sm:$0x3]
      %v1063 = vld [vmem:[%s3] sm:$0xff]
      %v1064 = vld [vmem:[%s3 + $0x8] sm:$0xf]
      %v1066 = vperm.slane %v1062, 0
      %v1067 = vperm.slane %v1062, 1
      %vm1070 = vcmask 162816
      %v1072 = vsel %vm1070, %v1063, 0
      %v1075 = vsel %vm1070, %v1064, 0
      %v1078 = vsel %vm900, %v1034, 0
      %v1081 = vsel %vm900, %v1060, 0
      %1083 = vmatpush.msra.mxu0 0.0
      %1084 = vmatpush.msra.mxu0 0.0
      %1085 = vmatpush.msra.mxu0 0.0
      %1086 = vmatpush.msra.mxu0 0.0
      %1087 = vmatpush.msra.mxu0 0.0
      %1088 = vmatpush.msra.mxu0 0.0
      %1089 = vmatpush.msra.mxu0 0.0
      %1090 = vmatpush.msra.mxu0 0.0
      %1091 = vmatpush.msra.mxu0 0.0
      %1092 = vmatpush.msra.mxu0 0.0
      %1093 = vmatpush.msra.mxu0 0.0
      %1094 = vmatpush.msra.mxu0 0.0
      %1095 = vmatpush.msra.mxu0 0.0
      %1096 = vmatpush.msra.mxu0 %v1078
      %1097 = vmatpush.msra.mxu0 %v1031
      %1098 = vmatpush.msra.mxu0 %v1028
      %1099 = vmatmul.f32.gmra.mxu0 %v1072
      %v1100 = vpop.f32.mrf.mxu0
      %v1101 = vadd.f32 %v1066, %v1100
      %1102 = vmatmul.f32.gmra.mxu0 %v1075
      %v1103 = vpop.f32.mrf.mxu0
      %v1104 = vadd.f32 %v1066, %v1103
      %1105 = vdwg.mxu0
      %1106 = vmatpush.msra.mxu0 0.0
      %1107 = vmatpush.msra.mxu0 0.0
      %1108 = vmatpush.msra.mxu0 0.0
      %1109 = vmatpush.msra.mxu0 0.0
      %1110 = vmatpush.msra.mxu0 0.0
      %1111 = vmatpush.msra.mxu0 0.0
      %1112 = vmatpush.msra.mxu0 0.0
      %1113 = vmatpush.msra.mxu0 0.0
      %1114 = vmatpush.msra.mxu0 0.0
      %1115 = vmatpush.msra.mxu0 0.0
      %1116 = vmatpush.msra.mxu0 0.0
      %1117 = vmatpush.msra.mxu0 0.0
      %1118 = vmatpush.msra.mxu0 0.0
      %1119 = vmatpush.msra.mxu0 %v1081
      %1120 = vmatpush.msra.mxu0 %v1057
      %1121 = vmatpush.msra.mxu0 %v1054
      %1122 = vmatmul.f32.gmra.mxu0 %v1072
      %v1123 = vpop.f32.mrf.mxu0
      %v1124 = vadd.f32 %v1067, %v1123
      %1125 = vmatmul.f32.gmra.mxu0 %v1075
      %v1126 = vpop.f32.mrf.mxu0
      %v1127 = vadd.f32 %v1067, %v1126
      %1128 = vdwg.mxu0
      %v1129 = vmax.f32 %v1101, 0.0
      %v1130 = vmax.f32 %v1124, 0.0
      %v1131 = vmax.f32 %v1104, 0.0
      %v1132 = vmax.f32 %v1127, 0.0
      %s1133 = scalar_lea.vmem %s3, 16
      %v1134 = vld [vmem:[%s1133] sm:$0xff]
      %v1135 = vld [vmem:[%s1133 + $0x8] sm:$0xf]
      %v1137 = vsel %vm1070, %v1134, 0
      %v1140 = vsel %vm1070, %v1135, 0
      %1142 = vmatpush.msra.mxu0 0.0
      %1143 = vmatpush.msra.mxu0 0.0
      %1144 = vmatpush.msra.mxu0 0.0
      %1145 = vmatpush.msra.mxu0 0.0
      %1146 = vmatpush.msra.mxu0 0.0
      %1147 = vmatpush.msra.mxu0 0.0
      %1148 = vmatpush.msra.mxu0 0.0
      %1149 = vmatpush.msra.mxu0 0.0
      %1150 = vmatpush.msra.mxu0 0.0
      %1151 = vmatpush.msra.mxu0 0.0
      %1152 = vmatpush.msra.mxu0 0.0
      %1153 = vmatpush.msra.mxu0 0.0
      %1154 = vmatpush.msra.mxu0 0.0
      %1155 = vmatpush.msra.mxu0 %v1078
      %1156 = vmatpush.msra.mxu0 %v1031
      %1157 = vmatpush.msra.mxu0 %v1028
      %1158 = vmatmul.f32.gmra.mxu0 %v1137
      %v1159 = vpop.f32.mrf.mxu0
      %v1160 = vadd.f32 %v1066, %v1159
      %1161 = vmatmul.f32.gmra.mxu0 %v1140
      %v1162 = vpop.f32.mrf.mxu0
      %v1163 = vadd.f32 %v1066, %v1162
      %1164 = vdwg.mxu0
      %1165 = vmatpush.msra.mxu0 0.0
      %1166 = vmatpush.msra.mxu0 0.0
      %1167 = vmatpush.msra.mxu0 0.0
      %1168 = vmatpush.msra.mxu0 0.0
      %1169 = vmatpush.msra.mxu0 0.0
      %1170 = vmatpush.msra.mxu0 0.0
      %1171 = vmatpush.msra.mxu0 0.0
      %1172 = vmatpush.msra.mxu0 0.0
      %1173 = vmatpush.msra.mxu0 0.0
      %1174 = vmatpush.msra.mxu0 0.0
      %1175 = vmatpush.msra.mxu0 0.0
      %1176 = vmatpush.msra.mxu0 0.0
      %1177 = vmatpush.msra.mxu0 0.0
      %1178 = vmatpush.msra.mxu0 %v1081
      %1179 = vmatpush.msra.mxu0 %v1057
      %1180 = vmatpush.msra.mxu0 %v1054
      %1181 = vmatmul.f32.gmra.mxu0 %v1137
      %v1182 = vpop.f32.mrf.mxu0
      %v1183 = vadd.f32 %v1067, %v1182
      %1184 = vmatmul.f32.gmra.mxu0 %v1140
      %v1185 = vpop.f32.mrf.mxu0
      %v1186 = vadd.f32 %v1067, %v1185
      %1187 = vdwg.mxu0
      %v1188 = vmax.f32 %v1160, 0.0
      %v1189 = vmax.f32 %v1183, 0.0
      %v1190 = vmax.f32 %v1163, 0.0
      %v1191 = vmax.f32 %v1186, 0.0
      %v1192 = vmax.f32 %v1129, %v1188
      %v1193 = vmax.f32 %v1130, %v1189
      %v1194 = vmax.f32 %v1131, %v1190
      %v1195 = vmax.f32 %v1132, %v1191
      %v1196 = vld [vmem:[%s10] sm:$0xff]
      %v1197 = vld [vmem:[%s10 + $0x8] sm:$0xff]
      %v1198 = vld [vmem:[%s10 + $0x10] sm:$0xff]
      %v1199 = vld [vmem:[%s10 + $0x18] sm:$0xff]
      %v1200 = vld [vmem:[%s10 + $0x20] sm:$0xff]
      %v1201 = vld [vmem:[%s10 + $0x28] sm:$0xff]
      %v1202 = vld [vmem:[%s10 + $0x30] sm:$0xff]
      %v1203 = vld [vmem:[%s10 + $0x38] sm:$0xff]
      %v1204 = vld [vmem:[%s10 + $0x40] sm:$0xff]
      %v1205 = vld [vmem:[%s10 + $0x48] sm:$0xff]
      %v1206 = vld [vmem:[%s10 + $0x50] sm:$0xff]
      %v1207 = vld [vmem:[%s10 + $0x58] sm:$0xff]
      %v1208 = vld [vmem:[%s10 + $0x60] sm:$0xff]
      %v1209 = vld [vmem:[%s10 + $0x68] sm:$0xff]
      %v1210 = vld [vmem:[%s10 + $0x70] sm:$0xff]
      %v1211 = vld [vmem:[%s10 + $0x78] sm:$0xff]
      %v1212 = vld [vmem:[%s10 + $0x80] sm:$0xff]
      %v1213 = vld [vmem:[%s10 + $0x88] sm:$0xff]
      %v1214 = vld [vmem:[%s10 + $0x90] sm:$0xff]
      %v1215 = vld [vmem:[%s10 + $0x98] sm:$0xff]
      %v1216 = vld [vmem:[%s10 + $0xa0] sm:$0xff]
      %v1217 = vld [vmem:[%s10 + $0xa8] sm:$0xff]
      %v1218 = vld [vmem:[%s10 + $0xb0] sm:$0xff]
      %v1219 = vld [vmem:[%s10 + $0xb8] sm:$0xff]
      %v1220 = vld [vmem:[%s10 + $0xc0] sm:$0xff]
      %v1221 = vld [vmem:[%s10 + $0xc8] sm:$0xff]
      %v1222 = vld [vmem:[%s10 + $0xd0] sm:$0xff]
      %v1223 = vld [vmem:[%s10 + $0xd8] sm:$0xff]
      %v1224 = vld [vmem:[%s10 + $0xe0] sm:$0xff]
      %v1225 = vld [vmem:[%s10 + $0xe8] sm:$0xff]
      %v1226 = vld [vmem:[%s10 + $0xf0] sm:$0xff]
      %v1227 = vld [vmem:[%s10 + $0xf8] sm:$0xff]
      %v1228 = vld [vmem:[%s10 + $0x100] sm:$0xff]
      %v1229 = vld [vmem:[%s10 + $0x108] sm:$0xff]
      %v1230 = vld [vmem:[%s10 + $0x110] sm:$0xff]
      %v1231 = vld [vmem:[%s10 + $0x118] sm:$0xff]
      %v1232 = vld [vmem:[%s10 + $0x120] sm:$0xff]
      %v1233 = vld [vmem:[%s10 + $0x128] sm:$0xff]
      %v1234 = vld [vmem:[%s10 + $0x130] sm:$0xff]
      %v1235 = vld [vmem:[%s10 + $0x138] sm:$0xff]
      %v1236 = vld [vmem:[%s10 + $0x140] sm:$0xff]
      %v1237 = vld [vmem:[%s10 + $0x148] sm:$0xff]
      %v1238 = vld [vmem:[%s10 + $0x150] sm:$0xff]
      %v1239 = vld [vmem:[%s10 + $0x158] sm:$0xff]
      %v1240 = vld [vmem:[%s10 + $0x160] sm:$0xff]
      %v1241 = vld [vmem:[%s10 + $0x168] sm:$0xff]
      %v1242 = vld [vmem:[%s10 + $0x170] sm:$0xff]
      %v1243 = vld [vmem:[%s10 + $0x178] sm:$0xff]
      %v1244 = vld [vmem:[%s10 + $0x180] sm:$0xff]
      %v1245 = vld [vmem:[%s10 + $0x188] sm:$0xff]
      %v1246 = vld [vmem:[%s10 + $0x190] sm:$0xff]
      %v1247 = vld [vmem:[%s10 + $0x198] sm:$0xff]
      %v1248 = vld [vmem:[%s10 + $0x1a0] sm:$0xff]
      %v1249 = vld [vmem:[%s10 + $0x1a8] sm:$0xff]
      %v1250 = vld [vmem:[%s10 + $0x1b0] sm:$0xff]
      %v1251 = vld [vmem:[%s10 + $0x1b8] sm:$0xff]
      %v1252 = vld [vmem:[%s10 + $0x1c0] sm:$0xff]
      %v1253 = vld [vmem:[%s10 + $0x1c8] sm:$0xff]
      %v1254 = vld [vmem:[%s10 + $0x1d0] sm:$0xff]
      %v1255 = vld [vmem:[%s10 + $0x1d8] sm:$0xff]
      %v1256 = vld [vmem:[%s10 + $0x1e0] sm:$0xff]
      %v1257 = vld [vmem:[%s10 + $0x1e8] sm:$0xff]
      %v1258 = vld [vmem:[%s10 + $0x1f0] sm:$0xff]
      %v1259 = vld [vmem:[%s10 + $0x1f8] sm:$0xff]
      %v1260 = vld [vmem:[%s10 + $0x200] sm:$0xff]
      %v1261 = vld [vmem:[%s10 + $0x208] sm:$0xff]
      %v1262 = vld [vmem:[%s10 + $0x210] sm:$0xff]
      %v1263 = vld [vmem:[%s10 + $0x218] sm:$0xff]
      %v1264 = vld [vmem:[%s10 + $0x220] sm:$0xff]
      %v1265 = vld [vmem:[%s10 + $0x228] sm:$0xff]
      %v1266 = vld [vmem:[%s10 + $0x230] sm:$0xff]
      %v1267 = vld [vmem:[%s10 + $0x238] sm:$0xff]
      %v1268 = vld [vmem:[%s10 + $0x240] sm:$0xff]
      %v1269 = vld [vmem:[%s10 + $0x248] sm:$0xff]
      %v1270 = vld [vmem:[%s10 + $0x250] sm:$0xff]
      %v1271 = vld [vmem:[%s10 + $0x258] sm:$0xff]
      %v1272 = vld [vmem:[%s10 + $0x260] sm:$0xff]
      %v1273 = vld [vmem:[%s10 + $0x268] sm:$0xff]
      %v1274 = vld [vmem:[%s10 + $0x270] sm:$0xff]
      %v1275 = vld [vmem:[%s10 + $0x278] sm:$0xff]
      %v1276 = vld [vmem:[%s10 + $0x280] sm:$0xff]
      %v1277 = vld [vmem:[%s10 + $0x288] sm:$0xff]
      %v1278 = vld [vmem:[%s10 + $0x290] sm:$0xff]
      %v1279 = vld [vmem:[%s10 + $0x298] sm:$0xff]
      %v1280 = vld [vmem:[%s10 + $0x2a0] sm:$0xff]
      %v1281 = vld [vmem:[%s10 + $0x2a8] sm:$0xff]
      %v1282 = vld [vmem:[%s10 + $0x2b0] sm:$0xff]
      %v1283 = vld [vmem:[%s10 + $0x2b8] sm:$0xff]
      %v1284 = vld [vmem:[%s10 + $0x2c0] sm:$0xff]
      %v1285 = vld [vmem:[%s10 + $0x2c8] sm:$0xff]
      %v1286 = vld [vmem:[%s10 + $0x2d0] sm:$0xff]
      %v1287 = vld [vmem:[%s10 + $0x2d8] sm:$0xff]
      %v1288 = vld [vmem:[%s10 + $0x2e0] sm:$0xff]
      %v1289 = vld [vmem:[%s10 + $0x2e8] sm:$0xff]
      %v1290 = vld [vmem:[%s10 + $0x2f0] sm:$0xff]
      %v1291 = vld [vmem:[%s10 + $0x2f8] sm:$0xff]
      %v1292 = vld [vmem:[%s11] sm:$0x7]
      %v1294 = vperm.slane %v1292, 0
      %v1295 = vperm.slane %v1292, 1
      %v1296 = vperm.slane %v1292, 2
      %1300 = vmatpush.msra.mxu0 %v1241
      %1301 = vmatpush.msra.mxu0 %v1238
      %1302 = vmatpush.msra.mxu0 %v1235
      %1303 = vmatpush.msra.mxu0 %v1232
      %1304 = vmatpush.msra.mxu0 %v1229
      %1305 = vmatpush.msra.mxu0 %v1226
      %1306 = vmatpush.msra.mxu0 %v1223
      %1307 = vmatpush.msra.mxu0 %v1220
      %1308 = vmatpush.msra.mxu0 %v1217
      %1309 = vmatpush.msra.mxu0 %v1214
      %1310 = vmatpush.msra.mxu0 %v1211
      %1311 = vmatpush.msra.mxu0 %v1208
      %1312 = vmatpush.msra.mxu0 %v1205
      %1313 = vmatpush.msra.mxu0 %v1202
      %1314 = vmatpush.msra.mxu0 %v1199
      %1315 = vmatpush.msra.mxu0 %v1196
      %1316 = vmatmul.f32.gmra.mxu0 %v1192
      %v1317 = vpop.f32.mrf.mxu0
      %v1318 = vadd.f32 %v1294, %v1317
      %1319 = vmatmul.f32.gmra.mxu0 %v1194
      %v1320 = vpop.f32.mrf.mxu0
      %v1321 = vadd.f32 %v1294, %v1320
      %1322 = vdwg.mxu0
      %1323 = vmatpush.msra.mxu0 %v1289
      %1324 = vmatpush.msra.mxu0 %v1286
      %1325 = vmatpush.msra.mxu0 %v1283
      %1326 = vmatpush.msra.mxu0 %v1280
      %1327 = vmatpush.msra.mxu0 %v1277
      %1328 = vmatpush.msra.mxu0 %v1274
      %1329 = vmatpush.msra.mxu0 %v1271
      %1330 = vmatpush.msra.mxu0 %v1268
      %1331 = vmatpush.msra.mxu0 %v1265
      %1332 = vmatpush.msra.mxu0 %v1262
      %1333 = vmatpush.msra.mxu0 %v1259
      %1334 = vmatpush.msra.mxu0 %v1256
      %1335 = vmatpush.msra.mxu0 %v1253
      %1336 = vmatpush.msra.mxu0 %v1250
      %1337 = vmatpush.msra.mxu0 %v1247
      %1338 = vmatpush.msra.mxu0 %v1244
      %1339 = vmatmul.f32.gmra.mxu0 %v1193
      %v1340 = vpop.f32.mrf.mxu0
      %v1341 = vadd.f32 %v1318, %v1340
      %1342 = vmatmul.f32.gmra.mxu0 %v1195
      %v1343 = vpop.f32.mrf.mxu0
      %v1344 = vadd.f32 %v1321, %v1343
      %1345 = vdwg.mxu0
      %1346 = vmatpush.msra.mxu0 %v1242
      %1347 = vmatpush.msra.mxu0 %v1239
      %1348 = vmatpush.msra.mxu0 %v1236
      %1349 = vmatpush.msra.mxu0 %v1233
      %1350 = vmatpush.msra.mxu0 %v1230
      %1351 = vmatpush.msra.mxu0 %v1227
      %1352 = vmatpush.msra.mxu0 %v1224
      %1353 = vmatpush.msra.mxu0 %v1221
      %1354 = vmatpush.msra.mxu0 %v1218
      %1355 = vmatpush.msra.mxu0 %v1215
      %1356 = vmatpush.msra.mxu0 %v1212
      %1357 = vmatpush.msra.mxu0 %v1209
      %1358 = vmatpush.msra.mxu0 %v1206
      %1359 = vmatpush.msra.mxu0 %v1203
      %1360 = vmatpush.msra.mxu0 %v1200
      %1361 = vmatpush.msra.mxu0 %v1197
      %1362 = vmatmul.f32.gmra.mxu0 %v1192
      %v1363 = vpop.f32.mrf.mxu0
      %v1364 = vadd.f32 %v1295, %v1363
      %1365 = vmatmul.f32.gmra.mxu0 %v1194
      %v1366 = vpop.f32.mrf.mxu0
      %v1367 = vadd.f32 %v1295, %v1366
      %1368 = vdwg.mxu0
      %1369 = vmatpush.msra.mxu0 %v1290
      %1370 = vmatpush.msra.mxu0 %v1287
      %1371 = vmatpush.msra.mxu0 %v1284
      %1372 = vmatpush.msra.mxu0 %v1281
      %1373 = vmatpush.msra.mxu0 %v1278
      %1374 = vmatpush.msra.mxu0 %v1275
      %1375 = vmatpush.msra.mxu0 %v1272
      %1376 = vmatpush.msra.mxu0 %v1269
      %1377 = vmatpush.msra.mxu0 %v1266
      %1378 = vmatpush.msra.mxu0 %v1263
      %1379 = vmatpush.msra.mxu0 %v1260
      %1380 = vmatpush.msra.mxu0 %v1257
      %1381 = vmatpush.msra.mxu0 %v1254
      %1382 = vmatpush.msra.mxu0 %v1251
      %1383 = vmatpush.msra.mxu0 %v1248
      %1384 = vmatpush.msra.mxu0 %v1245
      %1385 = vmatmul.f32.gmra.mxu0 %v1193
      %v1386 = vpop.f32.mrf.mxu0
      %v1387 = vadd.f32 %v1364, %v1386
      %1388 = vmatmul.f32.gmra.mxu0 %v1195
      %v1389 = vpop.f32.mrf.mxu0
      %v1390 = vadd.f32 %v1367, %v1389
      %1391 = vdwg.mxu0
      %1392 = vmatpush.msra.mxu0 %v1243
      %1393 = vmatpush.msra.mxu0 %v1240
      %1394 = vmatpush.msra.mxu0 %v1237
      %1395 = vmatpush.msra.mxu0 %v1234
      %1396 = vmatpush.msra.mxu0 %v1231
      %1397 = vmatpush.msra.mxu0 %v1228
      %1398 = vmatpush.msra.mxu0 %v1225
      %1399 = vmatpush.msra.mxu0 %v1222
      %1400 = vmatpush.msra.mxu0 %v1219
      %1401 = vmatpush.msra.mxu0 %v1216
      %1402 = vmatpush.msra.mxu0 %v1213
      %1403 = vmatpush.msra.mxu0 %v1210
      %1404 = vmatpush.msra.mxu0 %v1207
      %1405 = vmatpush.msra.mxu0 %v1204
      %1406 = vmatpush.msra.mxu0 %v1201
      %1407 = vmatpush.msra.mxu0 %v1198
      %1408 = vmatmul.f32.gmra.mxu0 %v1192
      %v1409 = vpop.f32.mrf.mxu0
      %v1410 = vadd.f32 %v1296, %v1409
      %1411 = vmatmul.f32.gmra.mxu0 %v1194
      %v1412 = vpop.f32.mrf.mxu0
      %v1413 = vadd.f32 %v1296, %v1412
      %1414 = vdwg.mxu0
      %1415 = vmatpush.msra.mxu0 %v1291
      %1416 = vmatpush.msra.mxu0 %v1288
      %1417 = vmatpush.msra.mxu0 %v1285
      %1418 = vmatpush.msra.mxu0 %v1282
      %1419 = vmatpush.msra.mxu0 %v1279
      %1420 = vmatpush.msra.mxu0 %v1276
      %1421 = vmatpush.msra.mxu0 %v1273
      %1422 = vmatpush.msra.mxu0 %v1270
      %1423 = vmatpush.msra.mxu0 %v1267
      %1424 = vmatpush.msra.mxu0 %v1264
      %1425 = vmatpush.msra.mxu0 %v1261
      %1426 = vmatpush.msra.mxu0 %v1258
      %1427 = vmatpush.msra.mxu0 %v1255
      %1428 = vmatpush.msra.mxu0 %v1252
      %1429 = vmatpush.msra.mxu0 %v1249
      %1430 = vmatpush.msra.mxu0 %v1246
      %1431 = vmatmul.f32.gmra.mxu0 %v1193
      %v1432 = vpop.f32.mrf.mxu0
      %v1433 = vadd.f32 %v1410, %v1432
      %1434 = vmatmul.f32.gmra.mxu0 %v1195
      %v1435 = vpop.f32.mrf.mxu0
      %v1436 = vadd.f32 %v1413, %v1435
      %1437 = vdwg.mxu0
      %v1438 = vld [vmem:[%s12] sm:$0xff]
      %v1439 = vld [vmem:[%s12 + $0x8] sm:$0xf]
      %1442 = vrot.lane.b32.xlu0 %v1433, 96
      %v1443 = vpop.permute.xlu0 %1442
      %1444 = vrot.lane.b32.xlu0 %v1436, 96
      %v1445 = vpop.permute.xlu0 %1444
      %vm1446 = vcmask 261120
      %v1447 = vsel %vm1446, %v1433, 0
      %v1449 = vsel %vm1446, %v1436, 0
      %v1451 = vsel %vm1446, %v1443, 0
      %v1453 = vsel %vm1446, %v1445, 0
      %1455 = vmatpush.xpose.msra.mxu0 0.0
      %1456 = vmatpush.xpose.msra.mxu0 0.0
      %1457 = vmatpush.xpose.msra.mxu0 0.0
      %1458 = vmatpush.xpose.msra.mxu0 0.0
      %1459 = vmatpush.xpose.msra.mxu0 0.0
      %1460 = vmatpush.xpose.msra.mxu0 0.0
      %1461 = vmatpush.xpose.msra.mxu0 0.0
      %1462 = vmatpush.xpose.msra.mxu0 0.0
      %1463 = vmatpush.xpose.msra.mxu0 0.0
      %1464 = vmatpush.xpose.msra.mxu0 0.0
      %1465 = vmatpush.xpose.msra.mxu0 0.0
      %1466 = vmatpush.xpose.msra.mxu0 0.0
      %1467 = vmatpush.xpose.msra.mxu0 0.0
      %1468 = vmatpush.xpose.msra.mxu0 0.0
      %1469 = vmatpush.xpose.msra.mxu0 %v1453
      %1470 = vmatpush.xpose.msra.mxu0 %v1451
      %1471 = vmatmul.f32.gmra.mxu0 %v1447
      %v1472 = vpop.f32.mrf.mxu0
      %v1473 = vadd.f32 %v1438, %v1472
      %1474 = vmatmul.f32.gmra.mxu0 %v1449
      %v1475 = vpop.f32.mrf.mxu0
      %v1476 = vadd.f32 %v1439, %v1475
      %1477 = vdwg.mxu0
      %vm1478 = vcmask 97280
      %v1479 = vsel %vm1478, %v1473, -inf
      %1480 = vmax.xlane.f32.xlu0 %v1479
      %v1481 = vpop.xlane.xlu0 %1480
      %vm1482 = vcmask 93184
      %v1483 = vsel %vm1482, %v1476, -inf
      %1484 = vmax.xlane.f32.xlu0 %v1483
      %v1485 = vpop.xlane.xlu0 %1484
      %v1486 = vsub.f32 %v1473, %v1481
      %v1487 = vsub.f32 %v1476, %v1485
      %v1488 = vmul.f32 %v1486, 1.442695
      %v1489 = vpow.pop %v1488
      %v1490 = vmul.f32 %v1487, 1.442695
      %v1491 = vpow.pop %v1490
      %v1492 = vsel %vm1478, %v1489, 0.0
      %1493 = vadd.xlane.f32.xlu0 %v1492
      %v1494 = vpop.xlane.xlu0 %1493
      %v1495 = vsel %vm1482, %v1491, 0.0
      %1496 = vadd.xlane.f32.xlu0 %v1495
      %v1497 = vpop.xlane.xlu0 %1496
      %v1498 = vrcp.pop %v1494
      %v1499 = vrcp.pop %v1497
      %v1500 = vmul.f32 %v1489, %v1498
      %v1501 = vmul.f32 %v1491, %v1499
      %v1502 = vld [vmem:[%s13] sm:$0xf]
      %v1504 = vsel %vm1478, %v1502, 0
      %v1507 = vsel %vm900, %v1501, 0
      %1509 = vmatpush.msra.mxu0 0.0
      %1510 = vmatpush.msra.mxu0 0.0
      %1511 = vmatpush.msra.mxu0 0.0
      %1512 = vmatpush.msra.mxu0 0.0
      %1513 = vmatpush.msra.mxu0 0.0
      %1514 = vmatpush.msra.mxu0 0.0
      %1515 = vmatpush.msra.mxu0 0.0
      %1516 = vmatpush.msra.mxu0 0.0
      %1517 = vmatpush.msra.mxu0 0.0
      %1518 = vmatpush.msra.mxu0 0.0
      %1519 = vmatpush.msra.mxu0 0.0
      %1520 = vmatpush.msra.mxu0 0.0
      %1521 = vmatpush.msra.mxu0 0.0
      %1522 = vmatpush.msra.mxu0 0.0
      %1523 = vmatpush.msra.mxu0 %v1507
      %1524 = vmatpush.msra.mxu0 %v1500
      %1525 = vmatmul.f32.gmra.mxu0 %v1504
      %v1526 = vpop.f32.mrf.mxu0
      %v1527 = vadd.f32 0.0, %v1526
      %1528 = vdwg.mxu0
      %v1530 = vsel %vm1478, %v1527, 0
      %v1533 = vsel %vm900, %v1344, 0
      %v1536 = vsel %vm900, %v1390, 0
      %1538 = vmatpush.msra.mxu0 0.0
      %1539 = vmatpush.msra.mxu0 0.0
      %1540 = vmatpush.msra.mxu0 0.0
      %1541 = vmatpush.msra.mxu0 0.0
      %1542 = vmatpush.msra.mxu0 0.0
      %1543 = vmatpush.msra.mxu0 0.0
      %1544 = vmatpush.msra.mxu0 0.0
      %1545 = vmatpush.msra.mxu0 0.0
      %1546 = vmatpush.msra.mxu0 0.0
      %1547 = vmatpush.msra.mxu0 0.0
      %1548 = vmatpush.msra.mxu0 0.0
      %1549 = vmatpush.msra.mxu0 0.0
      %1550 = vmatpush.msra.mxu0 0.0
      %1551 = vmatpush.msra.mxu0 0.0
      %1552 = vmatpush.msra.mxu0 %v1533
      %1553 = vmatpush.msra.mxu0 %v1341
      %1554 = vmatmul.f32.gmra.mxu0 %v1530
      %v1555 = vpop.f32.mrf.mxu0
      %v1556 = vadd.f32 0.0, %v1555
      %1557 = vdwg.mxu0
      %1558 = vmatpush.msra.mxu0 0.0
      %1559 = vmatpush.msra.mxu0 0.0
      %1560 = vmatpush.msra.mxu0 0.0
      %1561 = vmatpush.msra.mxu0 0.0
      %1562 = vmatpush.msra.mxu0 0.0
      %1563 = vmatpush.msra.mxu0 0.0
      %1564 = vmatpush.msra.mxu0 0.0
      %1565 = vmatpush.msra.mxu0 0.0
      %1566 = vmatpush.msra.mxu0 0.0
      %1567 = vmatpush.msra.mxu0 0.0
      %1568 = vmatpush.msra.mxu0 0.0
      %1569 = vmatpush.msra.mxu0 0.0
      %1570 = vmatpush.msra.mxu0 0.0
      %1571 = vmatpush.msra.mxu0 0.0
      %1572 = vmatpush.msra.mxu0 %v1536
      %1573 = vmatpush.msra.mxu0 %v1387
      %1574 = vmatmul.f32.gmra.mxu0 %v1530
      %v1575 = vpop.f32.mrf.mxu0
      %v1576 = vadd.f32 0.0, %v1575
      %1577 = vdwg.mxu0
      %v1578 = vld [vmem:[%s14] sm:$0xff]
      %v1579 = vld [vmem:[%s14 + $0x8] sm:$0xff]
      %v1580 = vld [vmem:[%s14 + $0x10] sm:$0xff]
      %v1581 = vld [vmem:[%s14 + $0x18] sm:$0xff]
      %v1582 = vld [vmem:[%s14 + $0x20] sm:$0xff]
      %v1583 = vld [vmem:[%s14 + $0x28] sm:$0xff]
      %v1584 = vld [vmem:[%s14 + $0x30] sm:$0xff]
      %v1585 = vld [vmem:[%s14 + $0x38] sm:$0xff]
      %v1586 = vld [vmem:[%s14 + $0x40] sm:$0xff]
      %v1587 = vld [vmem:[%s14 + $0x48] sm:$0xff]
      %v1588 = vld [vmem:[%s14 + $0x50] sm:$0xff]
      %v1589 = vld [vmem:[%s14 + $0x58] sm:$0xff]
      %v1590 = vld [vmem:[%s14 + $0x60] sm:$0xff]
      %v1591 = vld [vmem:[%s14 + $0x68] sm:$0xff]
      %v1592 = vld [vmem:[%s14 + $0x70] sm:$0xff]
      %v1593 = vld [vmem:[%s14 + $0x78] sm:$0xff]
      %v1594 = vld [vmem:[%s14 + $0x80] sm:$0xff]
      %v1595 = vld [vmem:[%s14 + $0x88] sm:$0xff]
      %v1596 = vld [vmem:[%s14 + $0x90] sm:$0xff]
      %v1597 = vld [vmem:[%s14 + $0x98] sm:$0xff]
      %v1598 = vld [vmem:[%s14 + $0xa0] sm:$0xff]
      %v1599 = vld [vmem:[%s14 + $0xa8] sm:$0xff]
      %v1600 = vld [vmem:[%s14 + $0xb0] sm:$0xff]
      %v1601 = vld [vmem:[%s14 + $0xb8] sm:$0xff]
      %v1602 = vld [vmem:[%s14 + $0xc0] sm:$0xff]
      %v1603 = vld [vmem:[%s14 + $0xc8] sm:$0xff]
      %v1604 = vld [vmem:[%s14 + $0xd0] sm:$0xff]
      %v1605 = vld [vmem:[%s14 + $0xd8] sm:$0xff]
      %v1606 = vld [vmem:[%s14 + $0xe0] sm:$0xff]
      %v1607 = vld [vmem:[%s14 + $0xe8] sm:$0xff]
      %v1608 = vld [vmem:[%s14 + $0xf0] sm:$0xff]
      %v1609 = vld [vmem:[%s14 + $0xf8] sm:$0xff]
      %v1610 = vld [vmem:[%s14 + $0x100] sm:$0xff]
      %v1611 = vld [vmem:[%s14 + $0x108] sm:$0xff]
      %v1612 = vld [vmem:[%s14 + $0x110] sm:$0xff]
      %v1613 = vld [vmem:[%s14 + $0x118] sm:$0xff]
      %v1614 = vld [vmem:[%s14 + $0x120] sm:$0xff]
      %v1615 = vld [vmem:[%s14 + $0x128] sm:$0xff]
      %v1616 = vld [vmem:[%s14 + $0x130] sm:$0xff]
      %v1617 = vld [vmem:[%s14 + $0x138] sm:$0xff]
      %v1618 = vld [vmem:[%s14 + $0x140] sm:$0xff]
      %v1619 = vld [vmem:[%s14 + $0x148] sm:$0xff]
      %v1620 = vld [vmem:[%s14 + $0x150] sm:$0xff]
      %v1621 = vld [vmem:[%s14 + $0x158] sm:$0xff]
      %v1622 = vld [vmem:[%s14 + $0x160] sm:$0xff]
      %v1623 = vld [vmem:[%s14 + $0x168] sm:$0xff]
      %v1624 = vld [vmem:[%s14 + $0x170] sm:$0xff]
      %v1625 = vld [vmem:[%s14 + $0x178] sm:$0xff]
      %v1626 = vld [vmem:[%s14 + $0x180] sm:$0xff]
      %v1627 = vld [vmem:[%s14 + $0x188] sm:$0xff]
      %v1628 = vld [vmem:[%s14 + $0x190] sm:$0xff]
      %v1629 = vld [vmem:[%s14 + $0x198] sm:$0xff]
      %v1630 = vld [vmem:[%s14 + $0x1a0] sm:$0xff]
      %v1631 = vld [vmem:[%s14 + $0x1a8] sm:$0xff]
      %v1632 = vld [vmem:[%s14 + $0x1b0] sm:$0xff]
      %v1633 = vld [vmem:[%s14 + $0x1b8] sm:$0xff]
      %v1634 = vld [vmem:[%s14 + $0x1c0] sm:$0xff]
      %v1635 = vld [vmem:[%s14 + $0x1c8] sm:$0xff]
      %v1636 = vld [vmem:[%s14 + $0x1d0] sm:$0xff]
      %v1637 = vld [vmem:[%s14 + $0x1d8] sm:$0xff]
      %v1638 = vld [vmem:[%s14 + $0x1e0] sm:$0xff]
      %v1639 = vld [vmem:[%s14 + $0x1e8] sm:$0xff]
      %v1640 = vld [vmem:[%s14 + $0x1f0] sm:$0xff]
      %v1641 = vld [vmem:[%s14 + $0x1f8] sm:$0xff]
      %v1642 = vld [vmem:[%s14 + $0x200] sm:$0xff]
      %v1643 = vld [vmem:[%s14 + $0x208] sm:$0xff]
      %v1644 = vld [vmem:[%s14 + $0x210] sm:$0xff]
      %v1645 = vld [vmem:[%s14 + $0x218] sm:$0xff]
      %v1646 = vld [vmem:[%s14 + $0x220] sm:$0xff]
      %v1647 = vld [vmem:[%s14 + $0x228] sm:$0xff]
      %v1648 = vld [vmem:[%s14 + $0x230] sm:$0xff]
      %v1649 = vld [vmem:[%s14 + $0x238] sm:$0xff]
      %v1650 = vld [vmem:[%s14 + $0x240] sm:$0xff]
      %v1651 = vld [vmem:[%s14 + $0x248] sm:$0xff]
      %v1652 = vld [vmem:[%s14 + $0x250] sm:$0xff]
      %v1653 = vld [vmem:[%s14 + $0x258] sm:$0xff]
      %v1654 = vld [vmem:[%s14 + $0x260] sm:$0xff]
      %v1655 = vld [vmem:[%s14 + $0x268] sm:$0xff]
      %v1656 = vld [vmem:[%s14 + $0x270] sm:$0xff]
      %v1657 = vld [vmem:[%s14 + $0x278] sm:$0xff]
      %v1658 = vld [vmem:[%s14 + $0x280] sm:$0xff]
      %v1659 = vld [vmem:[%s14 + $0x288] sm:$0xff]
      %v1660 = vld [vmem:[%s14 + $0x290] sm:$0xff]
      %v1661 = vld [vmem:[%s14 + $0x298] sm:$0xff]
      %v1662 = vld [vmem:[%s14 + $0x2a0] sm:$0xff]
      %v1663 = vld [vmem:[%s14 + $0x2a8] sm:$0xff]
      %v1664 = vld [vmem:[%s14 + $0x2b0] sm:$0xff]
      %v1665 = vld [vmem:[%s14 + $0x2b8] sm:$0xff]
      %v1666 = vld [vmem:[%s14 + $0x2c0] sm:$0xff]
      %v1667 = vld [vmem:[%s14 + $0x2c8] sm:$0xff]
      %v1668 = vld [vmem:[%s14 + $0x2d0] sm:$0xff]
      %v1669 = vld [vmem:[%s14 + $0x2d8] sm:$0xff]
      %v1670 = vld [vmem:[%s14 + $0x2e0] sm:$0xff]
      %v1671 = vld [vmem:[%s14 + $0x2e8] sm:$0xff]
      %v1672 = vld [vmem:[%s14 + $0x2f0] sm:$0xff]
      %v1673 = vld [vmem:[%s14 + $0x2f8] sm:$0xff]
      %v1674 = vld [vmem:[%s14 + $0x300] sm:$0xff]
      %v1675 = vld [vmem:[%s14 + $0x308] sm:$0xff]
      %v1676 = vld [vmem:[%s14 + $0x310] sm:$0xff]
      %v1677 = vld [vmem:[%s14 + $0x318] sm:$0xff]
      %v1678 = vld [vmem:[%s14 + $0x320] sm:$0xff]
      %v1679 = vld [vmem:[%s14 + $0x328] sm:$0xff]
      %v1680 = vld [vmem:[%s14 + $0x330] sm:$0xff]
      %v1681 = vld [vmem:[%s14 + $0x338] sm:$0xff]
      %v1682 = vld [vmem:[%s14 + $0x340] sm:$0xff]
      %v1683 = vld [vmem:[%s14 + $0x348] sm:$0xff]
      %v1684 = vld [vmem:[%s14 + $0x350] sm:$0xff]
      %v1685 = vld [vmem:[%s14 + $0x358] sm:$0xff]
      %v1686 = vld [vmem:[%s14 + $0x360] sm:$0xff]
      %v1687 = vld [vmem:[%s14 + $0x368] sm:$0xff]
      %v1688 = vld [vmem:[%s14 + $0x370] sm:$0xff]
      %v1689 = vld [vmem:[%s14 + $0x378] sm:$0xff]
      %v1690 = vld [vmem:[%s14 + $0x380] sm:$0xff]
      %v1691 = vld [vmem:[%s14 + $0x388] sm:$0xff]
      %v1692 = vld [vmem:[%s14 + $0x390] sm:$0xff]
      %v1693 = vld [vmem:[%s14 + $0x398] sm:$0xff]
      %v1694 = vld [vmem:[%s14 + $0x3a0] sm:$0xff]
      %v1695 = vld [vmem:[%s14 + $0x3a8] sm:$0xff]
      %v1696 = vld [vmem:[%s14 + $0x3b0] sm:$0xff]
      %v1697 = vld [vmem:[%s14 + $0x3b8] sm:$0xff]
      %v1698 = vld [vmem:[%s14 + $0x3c0] sm:$0xff]
      %v1699 = vld [vmem:[%s14 + $0x3c8] sm:$0xff]
      %v1700 = vld [vmem:[%s14 + $0x3d0] sm:$0xff]
      %v1701 = vld [vmem:[%s14 + $0x3d8] sm:$0xff]
      %v1702 = vld [vmem:[%s14 + $0x3e0] sm:$0xff]
      %v1703 = vld [vmem:[%s14 + $0x3e8] sm:$0xff]
      %v1704 = vld [vmem:[%s14 + $0x3f0] sm:$0xff]
      %v1705 = vld [vmem:[%s14 + $0x3f8] sm:$0xff]
      %v1706 = vld [vmem:[%s15] sm:$0xf]
      %v1708 = vperm.slane %v1706, 0
      %v1709 = vperm.slane %v1706, 1
      %v1710 = vperm.slane %v1706, 2
      %v1711 = vperm.slane %v1706, 3
      %1716 = vmatpush.msra.mxu0 %v1638
      %1717 = vmatpush.msra.mxu0 %v1634
      %1718 = vmatpush.msra.mxu0 %v1630
      %1719 = vmatpush.msra.mxu0 %v1626
      %1720 = vmatpush.msra.mxu0 %v1622
      %1721 = vmatpush.msra.mxu0 %v1618
      %1722 = vmatpush.msra.mxu0 %v1614
      %1723 = vmatpush.msra.mxu0 %v1610
      %1724 = vmatpush.msra.mxu0 %v1606
      %1725 = vmatpush.msra.mxu0 %v1602
      %1726 = vmatpush.msra.mxu0 %v1598
      %1727 = vmatpush.msra.mxu0 %v1594
      %1728 = vmatpush.msra.mxu0 %v1590
      %1729 = vmatpush.msra.mxu0 %v1586
      %1730 = vmatpush.msra.mxu0 %v1582
      %1731 = vmatpush.msra.mxu0 %v1578
      %1732 = vmatmul.f32.gmra.mxu0 %v1556
      %v1733 = vpop.f32.mrf.mxu0
      %v1734 = vadd.f32 %v1708, %v1733
      %1735 = vdwg.mxu0
      %1736 = vmatpush.msra.mxu0 %v1702
      %1737 = vmatpush.msra.mxu0 %v1698
      %1738 = vmatpush.msra.mxu0 %v1694
      %1739 = vmatpush.msra.mxu0 %v1690
      %1740 = vmatpush.msra.mxu0 %v1686
      %1741 = vmatpush.msra.mxu0 %v1682
      %1742 = vmatpush.msra.mxu0 %v1678
      %1743 = vmatpush.msra.mxu0 %v1674
      %1744 = vmatpush.msra.mxu0 %v1670
      %1745 = vmatpush.msra.mxu0 %v1666
      %1746 = vmatpush.msra.mxu0 %v1662
      %1747 = vmatpush.msra.mxu0 %v1658
      %1748 = vmatpush.msra.mxu0 %v1654
      %1749 = vmatpush.msra.mxu0 %v1650
      %1750 = vmatpush.msra.mxu0 %v1646
      %1751 = vmatpush.msra.mxu0 %v1642
      %1752 = vmatmul.f32.gmra.mxu0 %v1576
      %v1753 = vpop.f32.mrf.mxu0
      %v1754 = vadd.f32 %v1734, %v1753
      %1755 = vdwg.mxu0
      %1756 = vmatpush.msra.mxu0 %v1639
      %1757 = vmatpush.msra.mxu0 %v1635
      %1758 = vmatpush.msra.mxu0 %v1631
      %1759 = vmatpush.msra.mxu0 %v1627
      %1760 = vmatpush.msra.mxu0 %v1623
      %1761 = vmatpush.msra.mxu0 %v1619
      %1762 = vmatpush.msra.mxu0 %v1615
      %1763 = vmatpush.msra.mxu0 %v1611
      %1764 = vmatpush.msra.mxu0 %v1607
      %1765 = vmatpush.msra.mxu0 %v1603
      %1766 = vmatpush.msra.mxu0 %v1599
      %1767 = vmatpush.msra.mxu0 %v1595
      %1768 = vmatpush.msra.mxu0 %v1591
      %1769 = vmatpush.msra.mxu0 %v1587
      %1770 = vmatpush.msra.mxu0 %v1583
      %1771 = vmatpush.msra.mxu0 %v1579
      %1772 = vmatmul.f32.gmra.mxu0 %v1556
      %v1773 = vpop.f32.mrf.mxu0
      %v1774 = vadd.f32 %v1709, %v1773
      %1775 = vdwg.mxu0
      %1776 = vmatpush.msra.mxu0 %v1703
      %1777 = vmatpush.msra.mxu0 %v1699
      %1778 = vmatpush.msra.mxu0 %v1695
      %1779 = vmatpush.msra.mxu0 %v1691
      %1780 = vmatpush.msra.mxu0 %v1687
      %1781 = vmatpush.msra.mxu0 %v1683
      %1782 = vmatpush.msra.mxu0 %v1679
      %1783 = vmatpush.msra.mxu0 %v1675
      %1784 = vmatpush.msra.mxu0 %v1671
      %1785 = vmatpush.msra.mxu0 %v1667
      %1786 = vmatpush.msra.mxu0 %v1663
      %1787 = vmatpush.msra.mxu0 %v1659
      %1788 = vmatpush.msra.mxu0 %v1655
      %1789 = vmatpush.msra.mxu0 %v1651
      %1790 = vmatpush.msra.mxu0 %v1647
      %1791 = vmatpush.msra.mxu0 %v1643
      %1792 = vmatmul.f32.gmra.mxu0 %v1576
      %v1793 = vpop.f32.mrf.mxu0
      %v1794 = vadd.f32 %v1774, %v1793
      %1795 = vdwg.mxu0
      %1796 = vmatpush.msra.mxu0 %v1640
      %1797 = vmatpush.msra.mxu0 %v1636
      %1798 = vmatpush.msra.mxu0 %v1632
      %1799 = vmatpush.msra.mxu0 %v1628
      %1800 = vmatpush.msra.mxu0 %v1624
      %1801 = vmatpush.msra.mxu0 %v1620
      %1802 = vmatpush.msra.mxu0 %v1616
      %1803 = vmatpush.msra.mxu0 %v1612
      %1804 = vmatpush.msra.mxu0 %v1608
      %1805 = vmatpush.msra.mxu0 %v1604
      %1806 = vmatpush.msra.mxu0 %v1600
      %1807 = vmatpush.msra.mxu0 %v1596
      %1808 = vmatpush.msra.mxu0 %v1592
      %1809 = vmatpush.msra.mxu0 %v1588
      %1810 = vmatpush.msra.mxu0 %v1584
      %1811 = vmatpush.msra.mxu0 %v1580
      %1812 = vmatmul.f32.gmra.mxu0 %v1556
      %v1813 = vpop.f32.mrf.mxu0
      %v1814 = vadd.f32 %v1710, %v1813
      %1815 = vdwg.mxu0
      %1816 = vmatpush.msra.mxu0 %v1704
      %1817 = vmatpush.msra.mxu0 %v1700
      %1818 = vmatpush.msra.mxu0 %v1696
      %1819 = vmatpush.msra.mxu0 %v1692
      %1820 = vmatpush.msra.mxu0 %v1688
      %1821 = vmatpush.msra.mxu0 %v1684
      %1822 = vmatpush.msra.mxu0 %v1680
      %1823 = vmatpush.msra.mxu0 %v1676
      %1824 = vmatpush.msra.mxu0 %v1672
      %1825 = vmatpush.msra.mxu0 %v1668
      %1826 = vmatpush.msra.mxu0 %v1664
      %1827 = vmatpush.msra.mxu0 %v1660
      %1828 = vmatpush.msra.mxu0 %v1656
      %1829 = vmatpush.msra.mxu0 %v1652
      %1830 = vmatpush.msra.mxu0 %v1648
      %1831 = vmatpush.msra.mxu0 %v1644
      %1832 = vmatmul.f32.gmra.mxu0 %v1576
      %v1833 = vpop.f32.mrf.mxu0
      %v1834 = vadd.f32 %v1814, %v1833
      %1835 = vdwg.mxu0
      %1836 = vmatpush.msra.mxu0 %v1641
      %1837 = vmatpush.msra.mxu0 %v1637
      %1838 = vmatpush.msra.mxu0 %v1633
      %1839 = vmatpush.msra.mxu0 %v1629
      %1840 = vmatpush.msra.mxu0 %v1625
      %1841 = vmatpush.msra.mxu0 %v1621
      %1842 = vmatpush.msra.mxu0 %v1617
      %1843 = vmatpush.msra.mxu0 %v1613
      %1844 = vmatpush.msra.mxu0 %v1609
      %1845 = vmatpush.msra.mxu0 %v1605
      %1846 = vmatpush.msra.mxu0 %v1601
      %1847 = vmatpush.msra.mxu0 %v1597
      %1848 = vmatpush.msra.mxu0 %v1593
      %1849 = vmatpush.msra.mxu0 %v1589
      %1850 = vmatpush.msra.mxu0 %v1585
      %1851 = vmatpush.msra.mxu0 %v1581
      %1852 = vmatmul.f32.gmra.mxu0 %v1556
      %v1853 = vpop.f32.mrf.mxu0
      %v1854 = vadd.f32 %v1711, %v1853
      %1855 = vdwg.mxu0
      %1856 = vmatpush.msra.mxu0 %v1705
      %1857 = vmatpush.msra.mxu0 %v1701
      %1858 = vmatpush.msra.mxu0 %v1697
      %1859 = vmatpush.msra.mxu0 %v1693
      %1860 = vmatpush.msra.mxu0 %v1689
      %1861 = vmatpush.msra.mxu0 %v1685
      %1862 = vmatpush.msra.mxu0 %v1681
      %1863 = vmatpush.msra.mxu0 %v1677
      %1864 = vmatpush.msra.mxu0 %v1673
      %1865 = vmatpush.msra.mxu0 %v1669
      %1866 = vmatpush.msra.mxu0 %v1665
      %1867 = vmatpush.msra.mxu0 %v1661
      %1868 = vmatpush.msra.mxu0 %v1657
      %1869 = vmatpush.msra.mxu0 %v1653
      %1870 = vmatpush.msra.mxu0 %v1649
      %1871 = vmatpush.msra.mxu0 %v1645
      %1872 = vmatmul.f32.gmra.mxu0 %v1576
      %v1873 = vpop.f32.mrf.mxu0
      %v1874 = vadd.f32 %v1854, %v1873
      %1875 = vdwg.mxu0
      %v1876 = vmax.f32 %v1754, 0.0
      %v1877 = vmax.f32 %v1794, 0.0
      %v1878 = vmax.f32 %v1834, 0.0
      %v1879 = vmax.f32 %v1874, 0.0
      %v1880 = vld [vmem:[%s16] sm:$0xff]
      %v1881 = vld [vmem:[%s16 + $0x8] sm:$0xff]
      %v1882 = vld [vmem:[%s16 + $0x10] sm:$0xff]
      %v1883 = vld [vmem:[%s16 + $0x18] sm:$0xff]
      %v1884 = vld [vmem:[%s16 + $0x20] sm:$0xff]
      %v1885 = vld [vmem:[%s16 + $0x28] sm:$0xff]
      %v1886 = vld [vmem:[%s16 + $0x30] sm:$0xff]
      %v1887 = vld [vmem:[%s16 + $0x38] sm:$0xff]
      %v1888 = vld [vmem:[%s16 + $0x40] sm:$0xff]
      %v1889 = vld [vmem:[%s16 + $0x48] sm:$0xff]
      %v1890 = vld [vmem:[%s16 + $0x50] sm:$0xff]
      %v1891 = vld [vmem:[%s16 + $0x58] sm:$0xff]
      %v1892 = vld [vmem:[%s16 + $0x60] sm:$0xff]
      %v1893 = vld [vmem:[%s16 + $0x68] sm:$0xff]
      %v1894 = vld [vmem:[%s16 + $0x70] sm:$0xff]
      %v1895 = vld [vmem:[%s16 + $0x78] sm:$0xff]
      %v1896 = vld [vmem:[%s16 + $0x80] sm:$0xff]
      %v1897 = vld [vmem:[%s16 + $0x88] sm:$0xff]
      %v1898 = vld [vmem:[%s16 + $0x90] sm:$0xff]
      %v1899 = vld [vmem:[%s16 + $0x98] sm:$0xff]
      %v1900 = vld [vmem:[%s16 + $0xa0] sm:$0xff]
      %v1901 = vld [vmem:[%s16 + $0xa8] sm:$0xff]
      %v1902 = vld [vmem:[%s16 + $0xb0] sm:$0xff]
      %v1903 = vld [vmem:[%s16 + $0xb8] sm:$0xff]
      %v1904 = vld [vmem:[%s16 + $0xc0] sm:$0xff]
      %v1905 = vld [vmem:[%s16 + $0xc8] sm:$0xff]
      %v1906 = vld [vmem:[%s16 + $0xd0] sm:$0xff]
      %v1907 = vld [vmem:[%s16 + $0xd8] sm:$0xff]
      %v1908 = vld [vmem:[%s16 + $0xe0] sm:$0xff]
      %v1909 = vld [vmem:[%s16 + $0xe8] sm:$0xff]
      %v1910 = vld [vmem:[%s16 + $0xf0] sm:$0xff]
      %v1911 = vld [vmem:[%s16 + $0xf8] sm:$0xff]
      %v1912 = vld [vmem:[%s16 + $0x100] sm:$0xff]
      %v1913 = vld [vmem:[%s16 + $0x108] sm:$0xff]
      %v1914 = vld [vmem:[%s16 + $0x110] sm:$0xff]
      %v1915 = vld [vmem:[%s16 + $0x118] sm:$0xff]
      %v1916 = vld [vmem:[%s16 + $0x120] sm:$0xff]
      %v1917 = vld [vmem:[%s16 + $0x128] sm:$0xff]
      %v1918 = vld [vmem:[%s16 + $0x130] sm:$0xff]
      %v1919 = vld [vmem:[%s16 + $0x138] sm:$0xff]
      %v1920 = vld [vmem:[%s16 + $0x140] sm:$0xff]
      %v1921 = vld [vmem:[%s16 + $0x148] sm:$0xff]
      %v1922 = vld [vmem:[%s16 + $0x150] sm:$0xff]
      %v1923 = vld [vmem:[%s16 + $0x158] sm:$0xff]
      %v1924 = vld [vmem:[%s16 + $0x160] sm:$0xff]
      %v1925 = vld [vmem:[%s16 + $0x168] sm:$0xff]
      %v1926 = vld [vmem:[%s16 + $0x170] sm:$0xff]
      %v1927 = vld [vmem:[%s16 + $0x178] sm:$0xff]
      %v1928 = vld [vmem:[%s16 + $0x180] sm:$0xff]
      %v1929 = vld [vmem:[%s16 + $0x188] sm:$0xff]
      %v1930 = vld [vmem:[%s16 + $0x190] sm:$0xff]
      %v1931 = vld [vmem:[%s16 + $0x198] sm:$0xff]
      %v1932 = vld [vmem:[%s16 + $0x1a0] sm:$0xff]
      %v1933 = vld [vmem:[%s16 + $0x1a8] sm:$0xff]
      %v1934 = vld [vmem:[%s16 + $0x1b0] sm:$0xff]
      %v1935 = vld [vmem:[%s16 + $0x1b8] sm:$0xff]
      %v1936 = vld [vmem:[%s16 + $0x1c0] sm:$0xff]
      %v1937 = vld [vmem:[%s16 + $0x1c8] sm:$0xff]
      %v1938 = vld [vmem:[%s16 + $0x1d0] sm:$0xff]
      %v1939 = vld [vmem:[%s16 + $0x1d8] sm:$0xff]
      %v1940 = vld [vmem:[%s16 + $0x1e0] sm:$0xff]
      %v1941 = vld [vmem:[%s16 + $0x1e8] sm:$0xff]
      %v1942 = vld [vmem:[%s16 + $0x1f0] sm:$0xff]
      %v1943 = vld [vmem:[%s16 + $0x1f8] sm:$0xff]
      %v1944 = vld [vmem:[%s17] sm:$0x1]
      %v1946 = vperm.slane %v1944, 0
      %1948 = vmatpush.msra.mxu0 %v1895
      %1949 = vmatpush.msra.mxu0 %v1894
      %1950 = vmatpush.msra.mxu0 %v1893
      %1951 = vmatpush.msra.mxu0 %v1892
      %1952 = vmatpush.msra.mxu0 %v1891
      %1953 = vmatpush.msra.mxu0 %v1890
      %1954 = vmatpush.msra.mxu0 %v1889
      %1955 = vmatpush.msra.mxu0 %v1888
      %1956 = vmatpush.msra.mxu0 %v1887
      %1957 = vmatpush.msra.mxu0 %v1886
      %1958 = vmatpush.msra.mxu0 %v1885
      %1959 = vmatpush.msra.mxu0 %v1884
      %1960 = vmatpush.msra.mxu0 %v1883
      %1961 = vmatpush.msra.mxu0 %v1882
      %1962 = vmatpush.msra.mxu0 %v1881
      %1963 = vmatpush.msra.mxu0 %v1880
      %1964 = vmatmul.f32.gmra.mxu0 %v1876
      %v1965 = vpop.f32.mrf.mxu0
      %v1966 = vadd.f32 %v1946, %v1965
      %1967 = vdwg.mxu0
      %1968 = vmatpush.msra.mxu0 %v1911
      %1969 = vmatpush.msra.mxu0 %v1910
      %1970 = vmatpush.msra.mxu0 %v1909
      %1971 = vmatpush.msra.mxu0 %v1908
      %1972 = vmatpush.msra.mxu0 %v1907
      %1973 = vmatpush.msra.mxu0 %v1906
      %1974 = vmatpush.msra.mxu0 %v1905
      %1975 = vmatpush.msra.mxu0 %v1904
      %1976 = vmatpush.msra.mxu0 %v1903
      %1977 = vmatpush.msra.mxu0 %v1902
      %1978 = vmatpush.msra.mxu0 %v1901
      %1979 = vmatpush.msra.mxu0 %v1900
      %1980 = vmatpush.msra.mxu0 %v1899
      %1981 = vmatpush.msra.mxu0 %v1898
      %1982 = vmatpush.msra.mxu0 %v1897
      %1983 = vmatpush.msra.mxu0 %v1896
      %1984 = vmatmul.f32.gmra.mxu0 %v1877
      %v1985 = vpop.f32.mrf.mxu0
      %v1986 = vadd.f32 %v1966, %v1985
      %1987 = vdwg.mxu0
      %1988 = vmatpush.msra.mxu0 %v1927
      %1989 = vmatpush.msra.mxu0 %v1926
      %1990 = vmatpush.msra.mxu0 %v1925
      %1991 = vmatpush.msra.mxu0 %v1924
      %1992 = vmatpush.msra.mxu0 %v1923
      %1993 = vmatpush.msra.mxu0 %v1922
      %1994 = vmatpush.msra.mxu0 %v1921
      %1995 = vmatpush.msra.mxu0 %v1920
      %1996 = vmatpush.msra.mxu0 %v1919
      %1997 = vmatpush.msra.mxu0 %v1918
      %1998 = vmatpush.msra.mxu0 %v1917
      %1999 = vmatpush.msra.mxu0 %v1916
      %2000 = vmatpush.msra.mxu0 %v1915
      %2001 = vmatpush.msra.mxu0 %v1914
      %2002 = vmatpush.msra.mxu0 %v1913
      %2003 = vmatpush.msra.mxu0 %v1912
      %2004 = vmatmul.f32.gmra.mxu0 %v1878
      %v2005 = vpop.f32.mrf.mxu0
      %v2006 = vadd.f32 %v1986, %v2005
      %2007 = vdwg.mxu0
      %2008 = vmatpush.msra.mxu0 %v1943
      %2009 = vmatpush.msra.mxu0 %v1942
      %2010 = vmatpush.msra.mxu0 %v1941
      %2011 = vmatpush.msra.mxu0 %v1940
      %2012 = vmatpush.msra.mxu0 %v1939
      %2013 = vmatpush.msra.mxu0 %v1938
      %2014 = vmatpush.msra.mxu0 %v1937
      %2015 = vmatpush.msra.mxu0 %v1936
      %2016 = vmatpush.msra.mxu0 %v1935
      %2017 = vmatpush.msra.mxu0 %v1934
      %2018 = vmatpush.msra.mxu0 %v1933
      %2019 = vmatpush.msra.mxu0 %v1932
      %2020 = vmatpush.msra.mxu0 %v1931
      %2021 = vmatpush.msra.mxu0 %v1930
      %2022 = vmatpush.msra.mxu0 %v1929
      %2023 = vmatpush.msra.mxu0 %v1928
      %2024 = vmatmul.f32.gmra.mxu0 %v1879
      %v2025 = vpop.f32.mrf.mxu0
      %v2026 = vadd.f32 %v2006, %v2025
      %2027 = vdwg.mxu0
      %v2028 = vmax.f32 %v2026, 0.0
      %v2029 = vld [vmem:[%s18] sm:$0xff]
      %v2030 = vld [vmem:[%s18 + $0x8] sm:$0xff]
      %v2031 = vld [vmem:[%s18 + $0x10] sm:$0xff]
      %v2032 = vld [vmem:[%s18 + $0x18] sm:$0xff]
      %v2033 = vld [vmem:[%s18 + $0x20] sm:$0xff]
      %v2034 = vld [vmem:[%s18 + $0x28] sm:$0xff]
      %v2035 = vld [vmem:[%s18 + $0x30] sm:$0xff]
      %v2036 = vld [vmem:[%s18 + $0x38] sm:$0xff]
      %v2037 = vld [vmem:[%s18 + $0x40] sm:$0xff]
      %v2038 = vld [vmem:[%s18 + $0x48] sm:$0xff]
      %v2039 = vld [vmem:[%s18 + $0x50] sm:$0xff]
      %v2040 = vld [vmem:[%s18 + $0x58] sm:$0xff]
      %v2041 = vld [vmem:[%s18 + $0x60] sm:$0xff]
      %v2042 = vld [vmem:[%s18 + $0x68] sm:$0xff]
      %v2043 = vld [vmem:[%s18 + $0x70] sm:$0xff]
      %v2044 = vld [vmem:[%s18 + $0x78] sm:$0xff]
      %v2045 = vld [vmem:[%s19] sm:$0x1]
      %v2047 = vperm.slane %v2045, 0
      %2049 = vmatpush.msra.mxu0 %v2044
      %2050 = vmatpush.msra.mxu0 %v2043
      %2051 = vmatpush.msra.mxu0 %v2042
      %2052 = vmatpush.msra.mxu0 %v2041
      %2053 = vmatpush.msra.mxu0 %v2040
      %2054 = vmatpush.msra.mxu0 %v2039
      %2055 = vmatpush.msra.mxu0 %v2038
      %2056 = vmatpush.msra.mxu0 %v2037
      %2057 = vmatpush.msra.mxu0 %v2036
      %2058 = vmatpush.msra.mxu0 %v2035
      %2059 = vmatpush.msra.mxu0 %v2034
      %2060 = vmatpush.msra.mxu0 %v2033
      %2061 = vmatpush.msra.mxu0 %v2032
      %2062 = vmatpush.msra.mxu0 %v2031
      %2063 = vmatpush.msra.mxu0 %v2030
      %2064 = vmatpush.msra.mxu0 %v2029
      %2065 = vmatmul.f32.gmra.mxu0 %v2028
      %v2066 = vpop.f32.mrf.mxu0
      %v2067 = vadd.f32 %v2047, %v2066
      %2068 = vdwg.mxu0
      %2069 = vst [vmem:[%s627] sm:$0xf] %v2067
      %p2070 = scmp.lt.s32.totalorder %s31, 1
      %s2071 = scalar_select %p2070, %s31, 1
      %s2072 = smul.addr %s2071, 4
      %s2073 = scalar_lea.vmem %s20, %s2072
      // Predicated region
      $region101: #{stock_cnn_forward.1} parent=99 // pred_check
        %p2074 = pneg %p474
      $region102: #{stock_cnn_forward.1} parent=99 // pred_check_branch
        %2076 = sbr.rel (%p2074) target = $region104
      $region103: #{stock_cnn_forward.1} parent=99 // pred_region
        _
      $region104: #{stock_cnn_forward.1} parent=99 // pred_fallthru
        _
    $region100: #{stock_cnn_forward.1} parent=5 // pred_fallthru
      _
    %p2077 = scmp.le.s32.totalorder 2, %s26
    // Predicated region
    $region105: #{stock_cnn_forward.1} parent=5 // pred_check
      %p2078 = pneg %p2077
    $region106: #{stock_cnn_forward.1} parent=5 // pred_check_branch
      %2080 = sbr.rel (%p2078) target = $region108
    $region107: #{stock_cnn_forward.1} parent=5 // pred_region
      %s2081 = ssub.s32 %s26, 2
      // Predicated region
      $region109: #{stock_cnn_forward.1} parent=107 // pred_check
        %p2082 = pneg %p480
      $region110: #{stock_cnn_forward.1} parent=107 // pred_check_branch
        %2084 = sbr.rel (%p2082) target = $region112
      $region111: #{stock_cnn_forward.1} parent=107 // pred_region
        %p2085 = scmp.lt.s32.totalorder %s32, 1
        %s2086 = scalar_select %p2085, %s32, 1
        %s2087 = smul.addr %s2086, 4
        %s2088 = scalar_lea.vmem %s20, %s2087
      $region112: #{stock_cnn_forward.1} parent=107 // pred_fallthru
        _
    $region108: #{stock_cnn_forward.1} parent=5 // pred_fallthru
      _
  $region6: #{stock_cnn_forward.1} parent=0 // loop_footer
    %s30 = sadd.s32 1, %s26
  $region7: #{stock_cnn_forward.1} parent=0 // loop_footer_branch
    %25 = sbr.rel target = $region3
  $region8: #{stock_cnn_forward.1} parent=0 // loop_exit
    _

</llo_original>
